<compile_context>
chip_gen: v5e
topology: v5e:2x2
jax: 0.10.0
libtpu: 0.0.40
codegen_flags: <defaults>
</compile_context>

<pallas_src>
import functools

import jax
import jax.numpy as jnp
from jax import lax
from jax.experimental import pallas as pl
from jax.experimental.pallas import tpu as pltpu

LANES = 128


def _default_vmem_limit():
    # Half of physical VMEM: 64 MiB on v5e/v6e (128 MiB), 32 MiB on v7x (64 MiB).
    try:
        cap = getattr(pltpu.get_tpu_info(), "vmem_capacity_bytes", None)
        if cap:
            return int(min(cap // 2, 96 * 1024 * 1024))
    except Exception:
        pass
    return 32 * 1024 * 1024


VMEM_LIMIT = _default_vmem_limit()


def _round_up(x, m):
    return (x + m - 1) // m * m


def _pick_row_tile(m, target):
    """Row tile: multiple of 8, <= target, chosen to minimize padded-row waste."""
    m8 = _round_up(max(m, 1), 8)
    if m8 <= target:
        return m8
    steps = -(-m // target)                      # ceil(m / target)
    return _round_up(-(-m // steps), 8)


def _pad_last(x, target):
    c = x.shape[-1]
    if c == target:
        return x
    cfg = [(0, 0)] * (x.ndim - 1) + [(0, target - c)]
    return jnp.pad(x, cfg)


def _im2col_s2(x):
    """3x3 / stride-2 / pad-1 patches with taps packed into the channel dim.

    x: (N, H, W, C) holding only the REAL channels.  Returns (N, Ho, Wo, 9*C)
    where lane index (3*i + j)*C + c corresponds to PyTorch weight[:, c, i, j].
    The packed slab is tiny because C is the real (unpadded) channel count.
    """
    _, H, W, _ = x.shape
    Ho = (H - 1) // 2 + 1
    Wo = (W - 1) // 2 + 1
    xp = jnp.pad(x, ((0, 0), (1, 1), (1, 1), (0, 0)))
    taps = []
    for i in range(3):
        for j in range(3):
            taps.append(xp[:, i::2, j::2, :][:, :Ho, :Wo, :])
    return jnp.concatenate(taps, axis=-1), Ho, Wo


# ---------------------------------------------------------------------------
# Kernel 1: packed 3x3/s2 conv (single MXU matmul) + bias + LayerNorm2d.
# ---------------------------------------------------------------------------
def _packed_conv_ln_kernel(p_ref, w_ref, b_ref, g_ref, bt_ref, o_ref, *,
                           c_out_real, eps):
    # One lane-dense matmul per row tile: (tm, Kp) @ (Kp, Coutp) -> f32.
    acc = jnp.dot(p_ref[...], w_ref[...], preferred_element_type=jnp.float32)
    acc = acc + b_ref[...]
    cpad = acc.shape[-1]
    lane = lax.broadcasted_iota(jnp.int32, (1, cpad), 1)
    mask = lane < c_out_real
    # Per-pixel LayerNorm over the REAL channels only (padded lanes masked).
    accm = jnp.where(mask, acc, 0.0)
    mu = jnp.sum(accm, axis=-1, keepdims=True) * (1.0 / c_out_real)
    d = jnp.where(mask, acc - mu, 0.0)
    var = jnp.sum(d * d, axis=-1, keepdims=True) * (1.0 / c_out_real)
    y = (acc - mu) * lax.rsqrt(var + eps) * g_ref[...] + bt_ref[...]
    o_ref[...] = y.astype(o_ref.dtype)


def packed_conv_ln(patches, w, b, g, bt, *, c_out_real, eps=1e-6,
                   out_dtype=jnp.bfloat16, tm_target=1024):
    """Fused [3x3 s2 conv as packed-K matmul] + bias + LayerNorm2d.

    patches: (M, Kp) bf16 rows = flattened (n, ho, wo); w: (Kp, Coutp) bf16.
    """
    M, Kp = patches.shape
    Coutp = w.shape[1]
    tm = _pick_row_tile(M, tm_target)
    Mp = _round_up(M, tm)
    if Mp != M:
        patches = jnp.pad(patches, ((0, Mp - M), (0, 0)))
    kernel = functools.partial(_packed_conv_ln_kernel,
                               c_out_real=c_out_real, eps=eps)
    out = pl.pallas_call(
        kernel,
        out_shape=jax.ShapeDtypeStruct((Mp, Coutp), out_dtype),
        grid=(Mp // tm,),
        in_specs=[
            pl.BlockSpec((tm, Kp), lambda i: (i, 0)),
            pl.BlockSpec((Kp, Coutp), lambda i: (0, 0)),
            pl.BlockSpec((1, Coutp), lambda i: (0, 0)),
            pl.BlockSpec((1, Coutp), lambda i: (0, 0)),
            pl.BlockSpec((1, Coutp), lambda i: (0, 0)),
        ],
        out_specs=pl.BlockSpec((tm, Coutp), lambda i: (i, 0)),
        compiler_params=pltpu.CompilerParams(
            dimension_semantics=("parallel",),
            vmem_limit_bytes=VMEM_LIMIT),
    )(patches, w, b.reshape(1, Coutp), g.reshape(1, Coutp), bt.reshape(1, Coutp))
    return out[:M] if Mp != M else out


# ---------------------------------------------------------------------------
# Kernel 2: packed conv2 + bias + LN2 + 1x1 conv + bias + global-avg-pool
#           accumulation + head LayerNorm + (dropout p=0) + fc, all fused.
# ---------------------------------------------------------------------------
def _conv2_head_kernel(p_ref, w2_ref, b2_ref, g2_ref, bt2_ref,
                       w3_ref, b3_ref, gh_ref, bh_ref, wf_ref, bf_ref,
                       o_ref, acc_ref, *, hw_real, rows_per_tile,
                       c_mid_real, c_feat_real, eps):
    t = pl.program_id(1)

    @pl.when(t == 0)
    def _init():
        acc_ref[...] = jnp.zeros_like(acc_ref)

    a = p_ref[0]                                                # (tr, K2p) bf16
    cpad = w2_ref.shape[1]
    lane = lax.broadcasted_iota(jnp.int32, (1, cpad), 1)

    # conv2 (taps packed into K) + bias.
    s = jnp.dot(a, w2_ref[...], preferred_element_type=jnp.float32) + b2_ref[...]
    # LayerNorm2d over the real channels (per pixel).
    cmask = lane < c_mid_real
    sm = jnp.where(cmask, s, 0.0)
    mu = jnp.sum(sm, axis=-1, keepdims=True) * (1.0 / c_mid_real)
    d = jnp.where(cmask, s - mu, 0.0)
    var = jnp.sum(d * d, axis=-1, keepdims=True) * (1.0 / c_mid_real)
    y = (s - mu) * lax.rsqrt(var + eps) * g2_ref[...] + bt2_ref[...]
    # 1x1 conv + bias, fused -- this activation never touches HBM.
    z = jnp.dot(y.astype(w3_ref.dtype), w3_ref[...],
                preferred_element_type=jnp.float32) + b3_ref[...]
    # Global-average-pool partial sum; mask rows padded past the real H*W.
    row = lax.broadcasted_iota(jnp.int32, (z.shape[0], 1), 0) + t * rows_per_tile
    zsum = jnp.sum(jnp.where(row < hw_real, z, 0.0), axis=0, keepdims=True)
    acc_ref[...] = acc_ref[...] + zsum          # broadcast-add into 8 equal rows

    @pl.when(t == pl.num_programs(1) - 1)
    def _finalize():
        pooled = acc_ref[...] * (1.0 / hw_real)                 # (8, Cpp), rows equal
        fmask = lane < c_feat_real
        pm = jnp.where(fmask, pooled, 0.0)
        mu2 = jnp.sum(pm, axis=-1, keepdims=True) * (1.0 / c_feat_real)
        d2 = jnp.where(fmask, pooled - mu2, 0.0)
        var2 = jnp.sum(d2 * d2, axis=-1, keepdims=True) * (1.0 / c_feat_real)
        yh = (pooled - mu2) * lax.rsqrt(var2 + eps) * gh_ref[...] + bh_ref[...]
        # flatten + dropout(p=drop_rate=0.0) is identity; fc:
        logits = jnp.dot(yh, wf_ref[...],
                         preferred_element_type=jnp.float32) + bf_ref[...]
        o_ref[0] = logits


def conv2_ln_1x1_pool_head(patches2, w2, b2, g2, bt2, w3, b3, gh, bh, wf, bf, *,
                           hw_real, c_mid_real, c_feat_real, eps=1e-6,
                           tr_target=512):
    """Fused conv2(3x3 s2, packed K) + LN2 + 1x1 conv + avg-pool + head LN + fc.

    patches2: (N, R, K2p) bf16, R = Ho2*Wo2.  Returns (N, Nclsp) f32 logits.
    """
    N, R, K2p = patches2.shape
    Cpp = w2.shape[1]
    Nclsp = wf.shape[1]
    tr = _pick_row_tile(R, tr_target)
    Rp = _round_up(R, tr)
    if Rp != R:
        patches2 = jnp.pad(patches2, ((0, 0), (0, Rp - R), (0, 0)))
    T = Rp // tr
    kernel = functools.partial(
        _conv2_head_kernel, hw_real=hw_real, rows_per_tile=tr,
        c_mid_real=c_mid_real, c_feat_real=c_feat_real, eps=eps)
    out = pl.pallas_call(
        kernel,
        out_shape=jax.ShapeDtypeStruct((N, 8, Nclsp), jnp.float32),
        grid=(N, T),
        in_specs=[
            pl.BlockSpec((1, tr, K2p), lambda n, t: (n, t, 0)),
            pl.BlockSpec((K2p, Cpp), lambda n, t: (0, 0)),
            pl.BlockSpec((1, Cpp), lambda n, t: (0, 0)),     # conv2 bias
            pl.BlockSpec((1, Cpp), lambda n, t: (0, 0)),     # ln2 gamma
            pl.BlockSpec((1, Cpp), lambda n, t: (0, 0)),     # ln2 beta
            pl.BlockSpec((Cpp, Cpp), lambda n, t: (0, 0)),   # 1x1 conv weight
            pl.BlockSpec((1, Cpp), lambda n, t: (0, 0)),     # 1x1 conv bias
            pl.BlockSpec((1, Cpp), lambda n, t: (0, 0)),     # head ln gamma
            pl.BlockSpec((1, Cpp), lambda n, t: (0, 0)),     # head ln beta
            pl.BlockSpec((Cpp, Nclsp), lambda n, t: (0, 0)), # fc weight
            pl.BlockSpec((1, Nclsp), lambda n, t: (0, 0)),   # fc bias
        ],
        out_specs=pl.BlockSpec((1, 8, Nclsp), lambda n, t: (n, 0, 0)),
        scratch_shapes=[pltpu.VMEM((8, Cpp), jnp.float32)],
        compiler_params=pltpu.CompilerParams(
            dimension_semantics=("parallel", "arbitrary"),
            vmem_limit_bytes=VMEM_LIMIT),
    )(patches2, w2, b2.reshape(1, Cpp), g2.reshape(1, Cpp), bt2.reshape(1, Cpp),
      w3, b3.reshape(1, Cpp), gh.reshape(1, Cpp), bh.reshape(1, Cpp),
      wf, bf.reshape(1, Nclsp))
    return out[:, 0, :]


# ---------------------------------------------------------------------------
# Fedconv parameters (packed / lane-padded layout, bf16 conv weights).
# ---------------------------------------------------------------------------
def init_fedconv_params(key, in_chans=3, channels=(32, 32, 32, 32), num_classes=10):
    inplanes = channels[0]
    c_half = inplanes // 2
    num_features = channels[-1]          # == inplanes (identity stages; see TODO)
    k1p = _round_up(9 * in_chans, LANES)
    k2p = _round_up(9 * c_half, LANES)
    c_half_p = _round_up(c_half, LANES)
    c_pl_p = _round_up(inplanes, LANES)
    c_feat_p = _round_up(num_features, LANES)
    ncls_p = _round_up(num_classes, LANES)
    ks = jax.random.split(key, 4)

    def tn(k, shape):   # trunc_normal_(std=0.02); biases 0; norms (1, 0)
        return (0.02 * jax.random.truncated_normal(k, -2.0, 2.0, shape)).astype(jnp.float32)

    def packed_conv_w(k, cin, cout, kp, cop):
        # Rows ordered (3*i + j)*cin + c, matching _im2col_s2's lane packing
        # (== PyTorch weight[co, c, i, j] permuted into (K, Cout)).
        w = tn(k, (3, 3, cin, cout)).reshape(9 * cin, cout)
        return jnp.pad(w, ((0, kp - 9 * cin), (0, cop - cout))).astype(jnp.bfloat16)

    def vec(c, cp, value):
        return jnp.pad(jnp.full((c,), value, jnp.float32), (0, cp - c))

    params = {
        "conv1_w": packed_conv_w(ks[0], in_chans, c_half, k1p, c_half_p),
        "conv1_b": vec(c_half, c_half_p, 0.0),
        "ln1_g": vec(c_half, c_half_p, 1.0),
        "ln1_b": vec(c_half, c_half_p, 0.0),
        "conv2_w": packed_conv_w(ks[1], c_half, inplanes, k2p, c_pl_p),
        "conv2_b": vec(inplanes, c_pl_p, 0.0),
        "ln2_g": vec(inplanes, c_pl_p, 1.0),
        "ln2_b": vec(inplanes, c_pl_p, 0.0),
        # 1x1 conv, stored as (Cin_p, Cout_p) == PyTorch weight.T
        "conv3_w": jnp.pad(tn(ks[2], (inplanes, inplanes)),
                           ((0, c_pl_p - inplanes), (0, c_pl_p - inplanes))
                           ).astype(jnp.bfloat16),
        "conv3_b": vec(inplanes, c_pl_p, 0.0),
        "head_ln_g": vec(num_features, c_feat_p, 1.0),
        "head_ln_b": vec(num_features, c_feat_p, 0.0),
        # fc, stored as (in_p, out_p) == PyTorch weight.T; f32 for logit accuracy.
        "head_fc_w": jnp.pad(tn(ks[3], (num_features, num_classes)),
                             ((0, c_feat_p - num_features), (0, ncls_p - num_classes))),
        "head_fc_b": jnp.zeros((ncls_p,), jnp.float32),
    }
    cfg = dict(in_chans=in_chans, c_half=c_half, inplanes=inplanes,
               num_features=num_features, num_classes=num_classes)
    return params, cfg


def make_fedconv_forward(cfg):
    c_half = cfg["c_half"]
    inplanes = cfg["inplanes"]
    num_features = cfg["num_features"]
    num_classes = cfg["num_classes"]
    # Identity residual stages: head input channels must equal num_features.
    assert num_features == inplanes, "use uniform `channels` with identity stages"

    def forward(params, x_nchw):
        # NCHW (PyTorch) -> NHWC; only REAL channels enter the im2col packers.
        x = jnp.transpose(x_nchw, (0, 2, 3, 1))
        N = x.shape[0]

        # --- stem conv1: 3x3/s2 + bias + LayerNorm2d (taps packed into lanes) ---
        p1, Ho, Wo = _im2col_s2(x)                         # (N, Ho, Wo, 9*in_chans)
        k1p = params["conv1_w"].shape[0]
        p1 = _pad_last(p1, k1p).astype(jnp.bfloat16)
        a1 = packed_conv_ln(p1.reshape(N * Ho * Wo, k1p),
                            params["conv1_w"], params["conv1_b"],
                            params["ln1_g"], params["ln1_b"], c_out_real=c_half)
        a1 = a1.reshape(N, Ho, Wo, -1)[..., :c_half]       # real channels only

        # --- stem conv2 ... head, fully fused in one kernel ---
        # TODO(synk): emit this packed layout directly from kernel 1's epilogue
        # instead of the small XLA im2col relayout on the (N,Ho,Wo,c_half) slice.
        p2, Ho2, Wo2 = _im2col_s2(a1)                      # (N, Ho2, Wo2, 9*c_half)
        k2p = params["conv2_w"].shape[0]
        p2 = _pad_last(p2, k2p).reshape(N, Ho2 * Wo2, k2p).astype(jnp.bfloat16)

        # TODO(synk): `block` (block_fn for layer1..layer4) is a constructor
        # argument not defined in models/fedconv.py, so the residual stages are
        # identity here (channels kept uniform so num_features matches the head).
        logits = conv2_ln_1x1_pool_head(
            p2,
            params["conv2_w"], params["conv2_b"], params["ln2_g"], params["ln2_b"],
            params["conv3_w"], params["conv3_b"],
            params["head_ln_g"], params["head_ln_b"],
            params["head_fc_w"], params["head_fc_b"],
            hw_real=Ho2 * Wo2, c_mid_real=inplanes, c_feat_real=num_features)
        return logits[:, :num_classes]

    return jax.jit(forward)


if __name__ == "__main__":
    key = jax.random.PRNGKey(0)
    kx, kp = jax.random.split(key)

    N, in_chans, H, W = 2, 3, 16, 16
    channels = (32, 32, 32, 32)
    num_classes = 10

    x = jax.random.normal(kx, (N, in_chans, H, W), jnp.float32)   # NCHW, like PyTorch
    params, cfg = init_fedconv_params(kp, in_chans=in_chans, channels=channels,
                                      num_classes=num_classes)
    forward = make_fedconv_forward(cfg)

    logits = forward(params, x)
    jax.block_until_ready(logits)
    assert logits.shape == (N, num_classes)
    print("KERNEL_OK")
</pallas_src>

<mosaic_0001>
module attributes {stable_mosaic.version = 11 : i64} {
  func.func @_packed_conv_ln_kernel(%arg0: i32, %arg1: memref<128x128xbf16, #tpu.memory_space<vmem>>, %arg2: memref<128x128xbf16, #tpu.memory_space<vmem>>, %arg3: memref<1x128xf32, #tpu.memory_space<vmem>>, %arg4: memref<1x128xf32, #tpu.memory_space<vmem>>, %arg5: memref<1x128xf32, #tpu.memory_space<vmem>>, %arg6: memref<128x128xbf16, #tpu.memory_space<vmem>>) attributes {dimension_semantics = [#tpu.dimension_semantics<parallel>], iteration_bounds = array<i64: 1>, scalar_prefetch = 0 : i64, scratch_operands = 0 : i64, tpu.core_type = #tpu.core_type<tc>, window_params = [{transform_indices = @transform_0, window_bounds = array<i64: 128, 128>}, {pipeline_mode = #tpu.pipeline_mode<synchronous>, transform_indices = @transform_1, window_bounds = array<i64: 128, 128>}, {pipeline_mode = #tpu.pipeline_mode<synchronous>, transform_indices = @transform_2, window_bounds = array<i64: 1, 128>}, {pipeline_mode = #tpu.pipeline_mode<synchronous>, transform_indices = @transform_3, window_bounds = array<i64: 1, 128>}, {pipeline_mode = #tpu.pipeline_mode<synchronous>, transform_indices = @transform_4, window_bounds = array<i64: 1, 128>}, {transform_indices = @transform_5, window_bounds = array<i64: 128, 128>}]} {
    %c0 = arith.constant 0 : index
    %c0_0 = arith.constant 0 : index
    %0 = vector.load %arg1[%c0, %c0_0] : memref<128x128xbf16, #tpu.memory_space<vmem>>, vector<128x128xbf16>
    %c0_1 = arith.constant 0 : index
    %c0_2 = arith.constant 0 : index
    %1 = vector.load %arg2[%c0_1, %c0_2] : memref<128x128xbf16, #tpu.memory_space<vmem>>, vector<128x128xbf16>
    %cst = arith.constant dense<0.000000e+00> : vector<128x128xf32>
    %2 = tpu.matmul %0, %1, %cst {dimension_numbers = #tpu.dot_dimension_numbers<[1], [0], [0], [1], [0, 0, 1, 1], [], []>} : vector<128x128xbf16>, vector<128x128xbf16>, vector<128x128xf32> -> vector<128x128xf32>
    %c0_3 = arith.constant 0 : index
    %c0_4 = arith.constant 0 : index
    %3 = vector.load %arg3[%c0_3, %c0_4] : memref<1x128xf32, #tpu.memory_space<vmem>>, vector<1x128xf32>
    %4 = vector.broadcast %3 : vector<1x128xf32> to vector<128x128xf32>
    %5 = arith.addf %2, %4 : vector<128x128xf32>
    %6 = tpu.iota {dimensions = array<i32: 1>} : vector<1x128xi32>
    %c16_i32 = arith.constant 16 : i32
    %7 = vector.broadcast %c16_i32 : i32 to vector<1x128xi32>
    %8 = arith.cmpi slt, %6, %7 : vector<1x128xi32>
    %cst_5 = arith.constant 0.000000e+00 : f32
    %9 = vector.shape_cast %8 : vector<1x128xi1> to vector<1x128xi1>
    %10 = vector.broadcast %9 : vector<1x128xi1> to vector<128x128xi1>
    %11 = vector.broadcast %cst_5 : f32 to vector<128x128xf32>
    %12 = arith.select %10, %5, %11 : vector<128x128xi1>, vector<128x128xf32>
    %cst_6 = arith.constant dense<0.000000e+00> : vector<128xf32>
    %13 = vector.multi_reduction <add>, %12, %cst_6 [1] : vector<128x128xf32> to vector<128xf32>
    %14 = vector.shape_cast %13 : vector<128xf32> to vector<128x1xf32>
    %cst_7 = arith.constant 6.250000e-02 : f32
    %15 = vector.broadcast %cst_7 : f32 to vector<128x1xf32>
    %16 = arith.mulf %14, %15 : vector<128x1xf32>
    %17 = vector.broadcast %16 : vector<128x1xf32> to vector<128x128xf32>
    %18 = arith.subf %5, %17 : vector<128x128xf32>
    %cst_8 = arith.constant 0.000000e+00 : f32
    %19 = vector.shape_cast %8 : vector<1x128xi1> to vector<1x128xi1>
    %20 = vector.broadcast %19 : vector<1x128xi1> to vector<128x128xi1>
    %21 = vector.broadcast %cst_8 : f32 to vector<128x128xf32>
    %22 = arith.select %20, %18, %21 : vector<128x128xi1>, vector<128x128xf32>
    %23 = arith.mulf %22, %22 : vector<128x128xf32>
    %cst_9 = arith.constant dense<0.000000e+00> : vector<128xf32>
    %24 = vector.multi_reduction <add>, %23, %cst_9 [1] : vector<128x128xf32> to vector<128xf32>
    %25 = vector.shape_cast %24 : vector<128xf32> to vector<128x1xf32>
    %cst_10 = arith.constant 6.250000e-02 : f32
    %26 = vector.broadcast %cst_10 : f32 to vector<128x1xf32>
    %27 = arith.mulf %25, %26 : vector<128x1xf32>
    %28 = vector.broadcast %16 : vector<128x1xf32> to vector<128x128xf32>
    %29 = arith.subf %5, %28 : vector<128x128xf32>
    %cst_11 = arith.constant 9.99999997E-7 : f32
    %30 = vector.broadcast %cst_11 : f32 to vector<128x1xf32>
    %31 = arith.addf %27, %30 : vector<128x1xf32>
    %32 = math.rsqrt %31 : vector<128x1xf32>
    %33 = vector.broadcast %32 : vector<128x1xf32> to vector<128x128xf32>
    %34 = arith.mulf %29, %33 : vector<128x128xf32>
    %c0_12 = arith.constant 0 : index
    %c0_13 = arith.constant 0 : index
    %35 = vector.load %arg4[%c0_12, %c0_13] : memref<1x128xf32, #tpu.memory_space<vmem>>, vector<1x128xf32>
    %36 = vector.broadcast %35 : vector<1x128xf32> to vector<128x128xf32>
    %37 = arith.mulf %34, %36 : vector<128x128xf32>
    %c0_14 = arith.constant 0 : index
    %c0_15 = arith.constant 0 : index
    %38 = vector.load %arg5[%c0_14, %c0_15] : memref<1x128xf32, #tpu.memory_space<vmem>>, vector<1x128xf32>
    %39 = vector.broadcast %38 : vector<1x128xf32> to vector<128x128xf32>
    %40 = arith.addf %37, %39 : vector<128x128xf32>
    %41 = arith.truncf %40 : vector<128x128xf32> to vector<128x128xbf16>
    %c0_16 = arith.constant 0 : index
    %c0_17 = arith.constant 0 : index
    %42 = vector.load %arg6[%c0_16, %c0_17] : memref<128x128xbf16, #tpu.memory_space<vmem>>, vector<128x128xbf16>
    tpu.vector_store %arg6[%c0_16, %c0_17], %41 {strides = array<i32>} : memref<128x128xbf16, #tpu.memory_space<vmem>>, vector<128x128xbf16>,
    return
  }
  func.func @transform_0(%arg0: i32) -> (i32, i32) {
    %c0_i32 = arith.constant 0 : i32
    %c0_i32_0 = arith.constant 0 : i32
    return %arg0, %c0_i32 : i32, i32
  }
  func.func @transform_1(%arg0: i32) -> (i32, i32) {
    %c0_i32 = arith.constant 0 : i32
    %c0_i32_0 = arith.constant 0 : i32
    %c0_i32_1 = arith.constant 0 : i32
    return %c0_i32, %c0_i32_0 : i32, i32
  }
  func.func @transform_2(%arg0: i32) -> (i32, i32) {
    %c0_i32 = arith.constant 0 : i32
    %c0_i32_0 = arith.constant 0 : i32
    %c0_i32_1 = arith.constant 0 : i32
    return %c0_i32, %c0_i32_0 : i32, i32
  }
  func.func @transform_3(%arg0: i32) -> (i32, i32) {
    %c0_i32 = arith.constant 0 : i32
    %c0_i32_0 = arith.constant 0 : i32
    %c0_i32_1 = arith.constant 0 : i32
    return %c0_i32, %c0_i32_0 : i32, i32
  }
  func.func @transform_4(%arg0: i32) -> (i32, i32) {
    %c0_i32 = arith.constant 0 : i32
    %c0_i32_0 = arith.constant 0 : i32
    %c0_i32_1 = arith.constant 0 : i32
    return %c0_i32, %c0_i32_0 : i32, i32
  }
  func.func @transform_5(%arg0: i32) -> (i32, i32) {
    %c0_i32 = arith.constant 0 : i32
    %c0_i32_0 = arith.constant 0 : i32
    return %arg0, %c0_i32 : i32, i32
  }
}

module attributes {stable_mosaic.version = 11 : i64} {
  func.func @_conv2_head_kernel(%arg0: i32, %arg1: i32, %arg2: memref<1x16x256xbf16, #tpu.memory_space<vmem>>, %arg3: memref<256x128xbf16, #tpu.memory_space<vmem>>, %arg4: memref<1x128xf32, #tpu.memory_space<vmem>>, %arg5: memref<1x128xf32, #tpu.memory_space<vmem>>, %arg6: memref<1x128xf32, #tpu.memory_space<vmem>>, %arg7: memref<128x128xbf16, #tpu.memory_space<vmem>>, %arg8: memref<1x128xf32, #tpu.memory_space<vmem>>, %arg9: memref<1x128xf32, #tpu.memory_space<vmem>>, %arg10: memref<1x128xf32, #tpu.memory_space<vmem>>, %arg11: memref<128x128xf32, #tpu.memory_space<vmem>>, %arg12: memref<1x128xf32, #tpu.memory_space<vmem>>, %arg13: memref<1x8x128xf32, #tpu.memory_space<vmem>>, %arg14: memref<8x128xf32, #tpu.memory_space<vmem>>) attributes {dimension_semantics = [#tpu.dimension_semantics<parallel>, #tpu.dimension_semantics<arbitrary>], iteration_bounds = array<i64: 2, 1>, scalar_prefetch = 0 : i64, scratch_operands = 1 : i64, tpu.core_type = #tpu.core_type<tc>, window_params = [{transform_indices = @transform_0, window_bounds = array<i64: 1, 16, 256>}, {pipeline_mode = #tpu.pipeline_mode<synchronous>, transform_indices = @transform_1, window_bounds = array<i64: 256, 128>}, {pipeline_mode = #tpu.pipeline_mode<synchronous>, transform_indices = @transform_2, window_bounds = array<i64: 1, 128>}, {pipeline_mode = #tpu.pipeline_mode<synchronous>, transform_indices = @transform_3, window_bounds = array<i64: 1, 128>}, {pipeline_mode = #tpu.pipeline_mode<synchronous>, transform_indices = @transform_4, window_bounds = array<i64: 1, 128>}, {pipeline_mode = #tpu.pipeline_mode<synchronous>, transform_indices = @transform_5, window_bounds = array<i64: 128, 128>}, {pipeline_mode = #tpu.pipeline_mode<synchronous>, transform_indices = @transform_6, window_bounds = array<i64: 1, 128>}, {pipeline_mode = #tpu.pipeline_mode<synchronous>, transform_indices = @transform_7, window_bounds = array<i64: 1, 128>}, {pipeline_mode = #tpu.pipeline_mode<synchronous>, transform_indices = @transform_8, window_bounds = array<i64: 1, 128>}, {pipeline_mode = #tpu.pipeline_mode<synchronous>, transform_indices = @transform_9, window_bounds = array<i64: 128, 128>}, {pipeline_mode = #tpu.pipeline_mode<synchronous>, transform_indices = @transform_10, window_bounds = array<i64: 1, 128>}, {transform_indices = @transform_11, window_bounds = array<i64: 1, 8, 128>}]} {
    %c0_i32 = arith.constant 0 : i32
    %0 = arith.cmpi eq, %arg1, %c0_i32 : i32
    %1 = arith.extui %0 : i1 to i32
    %c0_i32_0 = arith.constant 0 : i32
    %2 = arith.cmpi ne, %1, %c0_i32_0 : i32
    scf.if %2 {
      %cst_32 = arith.constant 0.000000e+00 : f32
      %70 = vector.broadcast %cst_32 : f32 to vector<8x128xf32>
      %c0_33 = arith.constant 0 : index
      %c0_34 = arith.constant 0 : index
      %71 = vector.load %arg14[%c0_33, %c0_34] : memref<8x128xf32, #tpu.memory_space<vmem>>, vector<8x128xf32>
      tpu.vector_store %arg14[%c0_33, %c0_34], %70 {strides = array<i32>} : memref<8x128xf32, #tpu.memory_space<vmem>>, vector<8x128xf32>,
    } else {
    }
    %c0 = arith.constant 0 : index
    %c0_1 = arith.constant 0 : index
    %c0_2 = arith.constant 0 : index
    %3 = vector.load %arg2[%c0, %c0_1, %c0_2] : memref<1x16x256xbf16, #tpu.memory_space<vmem>>, vector<1x16x256xbf16>
    %4 = vector.shape_cast %3 : vector<1x16x256xbf16> to vector<16x256xbf16>
    %5 = tpu.iota {dimensions = array<i32: 1>} : vector<1x128xi32>
    %c0_3 = arith.constant 0 : index
    %c0_4 = arith.constant 0 : index
    %6 = vector.load %arg3[%c0_3, %c0_4] : memref<256x128xbf16, #tpu.memory_space<vmem>>, vector<256x128xbf16>
    %cst = arith.constant dense<0.000000e+00> : vector<16x128xf32>
    %7 = tpu.matmul %4, %6, %cst {dimension_numbers = #tpu.dot_dimension_numbers<[1], [0], [0], [1], [0, 0, 1, 1], [], []>} : vector<16x256xbf16>, vector<256x128xbf16>, vector<16x128xf32> -> vector<16x128xf32>
    %c0_5 = arith.constant 0 : index
    %c0_6 = arith.constant 0 : index
    %8 = vector.load %arg4[%c0_5, %c0_6] : memref<1x128xf32, #tpu.memory_space<vmem>>, vector<1x128xf32>
    %9 = vector.broadcast %8 : vector<1x128xf32> to vector<16x128xf32>
    %10 = arith.addf %7, %9 : vector<16x128xf32>
    %c32_i32 = arith.constant 32 : i32
    %11 = vector.broadcast %c32_i32 : i32 to vector<1x128xi32>
    %12 = arith.cmpi slt, %5, %11 : vector<1x128xi32>
    %cst_7 = arith.constant 0.000000e+00 : f32
    %13 = vector.shape_cast %12 : vector<1x128xi1> to vector<1x128xi1>
    %14 = vector.broadcast %13 : vector<1x128xi1> to vector<16x128xi1>
    %15 = vector.broadcast %cst_7 : f32 to vector<16x128xf32>
    %16 = arith.select %14, %10, %15 : vector<16x128xi1>, vector<16x128xf32>
    %cst_8 = arith.constant dense<0.000000e+00> : vector<16xf32>
    %17 = vector.multi_reduction <add>, %16, %cst_8 [1] : vector<16x128xf32> to vector<16xf32>
    %18 = vector.shape_cast %17 : vector<16xf32> to vector<16x1xf32>
    %cst_9 = arith.constant 3.125000e-02 : f32
    %19 = vector.broadcast %cst_9 : f32 to vector<16x1xf32>
    %20 = arith.mulf %18, %19 : vector<16x1xf32>
    %21 = vector.broadcast %20 : vector<16x1xf32> to vector<16x128xf32>
    %22 = arith.subf %10, %21 : vector<16x128xf32>
    %cst_10 = arith.constant 0.000000e+00 : f32
    %23 = vector.shape_cast %12 : vector<1x128xi1> to vector<1x128xi1>
    %24 = vector.broadcast %23 : vector<1x128xi1> to vector<16x128xi1>
    %25 = vector.broadcast %cst_10 : f32 to vector<16x128xf32>
    %26 = arith.select %24, %22, %25 : vector<16x128xi1>, vector<16x128xf32>
    %27 = arith.mulf %26, %26 : vector<16x128xf32>
    %cst_11 = arith.constant dense<0.000000e+00> : vector<16xf32>
    %28 = vector.multi_reduction <add>, %27, %cst_11 [1] : vector<16x128xf32> to vector<16xf32>
    %29 = vector.shape_cast %28 : vector<16xf32> to vector<16x1xf32>
    %cst_12 = arith.constant 3.125000e-02 : f32
    %30 = vector.broadcast %cst_12 : f32 to vector<16x1xf32>
    %31 = arith.mulf %29, %30 : vector<16x1xf32>
    %32 = vector.broadcast %20 : vector<16x1xf32> to vector<16x128xf32>
    %33 = arith.subf %10, %32 : vector<16x128xf32>
    %cst_13 = arith.constant 9.99999997E-7 : f32
    %34 = vector.broadcast %cst_13 : f32 to vector<16x1xf32>
    %35 = arith.addf %31, %34 : vector<16x1xf32>
    %36 = math.rsqrt %35 : vector<16x1xf32>
    %37 = vector.broadcast %36 : vector<16x1xf32> to vector<16x128xf32>
    %38 = arith.mulf %33, %37 : vector<16x128xf32>
    %c0_14 = arith.constant 0 : index
    %c0_15 = arith.constant 0 : index
    %39 = vector.load %arg5[%c0_14, %c0_15] : memref<1x128xf32, #tpu.memory_space<vmem>>, vector<1x128xf32>
    %40 = vector.broadcast %39 : vector<1x128xf32> to vector<16x128xf32>
    %41 = arith.mulf %38, %40 : vector<16x128xf32>
    %c0_16 = arith.constant 0 : index
    %c0_17 = arith.constant 0 : index
    %42 = vector.load %arg6[%c0_16, %c0_17] : memref<1x128xf32, #tpu.memory_space<vmem>>, vector<1x128xf32>
    %43 = vector.broadcast %42 : vector<1x128xf32> to vector<16x128xf32>
    %44 = arith.addf %41, %43 : vector<16x128xf32>
    %45 = arith.truncf %44 : vector<16x128xf32> to vector<16x128xbf16>
    %c0_18 = arith.constant 0 : index
    %c0_19 = arith.constant 0 : index
    %46 = vector.load %arg7[%c0_18, %c0_19] : memref<128x128xbf16, #tpu.memory_space<vmem>>, vector<128x128xbf16>
    %cst_20 = arith.constant dense<0.000000e+00> : vector<16x128xf32>
    %47 = tpu.matmul %45, %46, %cst_20 {dimension_numbers = #tpu.dot_dimension_numbers<[1], [0], [0], [1], [0, 0, 1, 1], [], []>} : vector<16x128xbf16>, vector<128x128xbf16>, vector<16x128xf32> -> vector<16x128xf32>
    %c0_21 = arith.constant 0 : index
    %c0_22 = arith.constant 0 : index
    %48 = vector.load %arg8[%c0_21, %c0_22] : memref<1x128xf32, #tpu.memory_space<vmem>>, vector<1x128xf32>
    %49 = vector.broadcast %48 : vector<1x128xf32> to vector<16x128xf32>
    %50 = arith.addf %47, %49 : vector<16x128xf32>
    %51 = tpu.iota {dimensions = array<i32: 0>} : vector<16x1xi32>
    %c16_i32 = arith.constant 16 : i32
    %52 = arith.muli %arg1, %c16_i32 : i32
    %53 = vector.broadcast %52 : i32 to vector<16x1xi32>
    %54 = arith.addi %51, %53 : vector<16x1xi32>
    %c16_i32_23 = arith.constant 16 : i32
    %55 = vector.broadcast %c16_i32_23 : i32 to vector<16x1xi32>
    %56 = arith.cmpi slt, %54, %55 : vector<16x1xi32>
    %cst_24 = arith.constant 0.000000e+00 : f32
    %57 = vector.shape_cast %56 : vector<16x1xi1> to vector<16x1xi1>
    %58 = vector.broadcast %57 : vector<16x1xi1> to vector<16x128xi1>
    %59 = vector.broadcast %cst_24 : f32 to vector<16x128xf32>
    %60 = arith.select %58, %50, %59 : vector<16x128xi1>, vector<16x128xf32>
    %cst_25 = arith.constant dense<0.000000e+00> : vector<128xf32>
    %61 = vector.multi_reduction <add>, %60, %cst_25 [0] : vector<16x128xf32> to vector<128xf32>
    %62 = vector.shape_cast %61 : vector<128xf32> to vector<1x128xf32>
    %c0_26 = arith.constant 0 : index
    %c0_27 = arith.constant 0 : index
    %63 = vector.load %arg14[%c0_26, %c0_27] : memref<8x128xf32, #tpu.memory_space<vmem>>, vector<8x128xf32>
    %64 = vector.broadcast %62 : vector<1x128xf32> to vector<8x128xf32>
    %65 = arith.addf %63, %64 : vector<8x128xf32>
    %c0_28 = arith.constant 0 : index
    %c0_29 = arith.constant 0 : index
    %66 = vector.load %arg14[%c0_28, %c0_29] : memref<8x128xf32, #tpu.memory_space<vmem>>, vector<8x128xf32>
    tpu.vector_store %arg14[%c0_28, %c0_29], %65 {strides = array<i32>} : memref<8x128xf32, #tpu.memory_space<vmem>>, vector<8x128xf32>,
    %c0_i32_30 = arith.constant 0 : i32
    %67 = arith.cmpi eq, %arg1, %c0_i32_30 : i32
    %68 = arith.extui %67 : i1 to i32
    %c0_i32_31 = arith.constant 0 : i32
    %69 = arith.cmpi ne, %68, %c0_i32_31 : i32
    scf.if %69 {
      %c0_32 = arith.constant 0 : index
      %c0_33 = arith.constant 0 : index
      %70 = vector.load %arg14[%c0_32, %c0_33] : memref<8x128xf32, #tpu.memory_space<vmem>>, vector<8x128xf32>
      %cst_34 = arith.constant 6.250000e-02 : f32
      %71 = vector.broadcast %cst_34 : f32 to vector<8x128xf32>
      %72 = arith.mulf %70, %71 : vector<8x128xf32>
      %c32_i32_35 = arith.constant 32 : i32
      %73 = vector.broadcast %c32_i32_35 : i32 to vector<1x128xi32>
      %74 = arith.cmpi slt, %5, %73 : vector<1x128xi32>
      %cst_36 = arith.constant 0.000000e+00 : f32
      %75 = vector.shape_cast %74 : vector<1x128xi1> to vector<1x128xi1>
      %76 = vector.broadcast %75 : vector<1x128xi1> to vector<8x128xi1>
      %77 = vector.broadcast %cst_36 : f32 to vector<8x128xf32>
      %78 = arith.select %76, %72, %77 : vector<8x128xi1>, vector<8x128xf32>
      %cst_37 = arith.constant dense<0.000000e+00> : vector<8xf32>
      %79 = vector.multi_reduction <add>, %78, %cst_37 [1] : vector<8x128xf32> to vector<8xf32>
      %80 = vector.shape_cast %79 : vector<8xf32> to vector<8x1xf32>
      %cst_38 = arith.constant 3.125000e-02 : f32
      %81 = vector.broadcast %cst_38 : f32 to vector<8x1xf32>
      %82 = arith.mulf %80, %81 : vector<8x1xf32>
      %83 = vector.broadcast %82 : vector<8x1xf32> to vector<8x128xf32>
      %84 = arith.subf %72, %83 : vector<8x128xf32>
      %cst_39 = arith.constant 0.000000e+00 : f32
      %85 = vector.shape_cast %74 : vector<1x128xi1> to vector<1x128xi1>
      %86 = vector.broadcast %85 : vector<1x128xi1> to vector<8x128xi1>
      %87 = vector.broadcast %cst_39 : f32 to vector<8x128xf32>
      %88 = arith.select %86, %84, %87 : vector<8x128xi1>, vector<8x128xf32>
      %89 = arith.mulf %88, %88 : vector<8x128xf32>
      %cst_40 = arith.constant dense<0.000000e+00> : vector<8xf32>
      %90 = vector.multi_reduction <add>, %89, %cst_40 [1] : vector<8x128xf32> to vector<8xf32>
      %91 = vector.shape_cast %90 : vector<8xf32> to vector<8x1xf32>
      %cst_41 = arith.constant 3.125000e-02 : f32
      %92 = vector.broadcast %cst_41 : f32 to vector<8x1xf32>
      %93 = arith.mulf %91, %92 : vector<8x1xf32>
      %94 = vector.broadcast %82 : vector<8x1xf32> to vector<8x128xf32>
      %95 = arith.subf %72, %94 : vector<8x128xf32>
      %cst_42 = arith.constant 9.99999997E-7 : f32
      %96 = vector.broadcast %cst_42 : f32 to vector<8x1xf32>
      %97 = arith.addf %93, %96 : vector<8x1xf32>
      %98 = math.rsqrt %97 : vector<8x1xf32>
      %99 = vector.broadcast %98 : vector<8x1xf32> to vector<8x128xf32>
      %100 = arith.mulf %95, %99 : vector<8x128xf32>
      %c0_43 = arith.constant 0 : index
      %c0_44 = arith.constant 0 : index
      %101 = vector.load %arg9[%c0_43, %c0_44] : memref<1x128xf32, #tpu.memory_space<vmem>>, vector<1x128xf32>
      %102 = vector.broadcast %101 : vector<1x128xf32> to vector<8x128xf32>
      %103 = arith.mulf %100, %102 : vector<8x128xf32>
      %c0_45 = arith.constant 0 : index
      %c0_46 = arith.constant 0 : index
      %104 = vector.load %arg10[%c0_45, %c0_46] : memref<1x128xf32, #tpu.memory_space<vmem>>, vector<1x128xf32>
      %105 = vector.broadcast %104 : vector<1x128xf32> to vector<8x128xf32>
      %106 = arith.addf %103, %105 : vector<8x128xf32>
      %c0_47 = arith.constant 0 : index
      %c0_48 = arith.constant 0 : index
      %107 = vector.load %arg11[%c0_47, %c0_48] : memref<128x128xf32, #tpu.memory_space<vmem>>, vector<128x128xf32>
      %cst_49 = arith.constant dense<0.000000e+00> : vector<8x128xf32>
      %108 = tpu.matmul %106, %107, %cst_49 {dimension_numbers = #tpu.dot_dimension_numbers<[1], [0], [0], [1], [0, 0, 1, 1], [], []>} : vector<8x128xf32>, vector<128x128xf32>, vector<8x128xf32> -> vector<8x128xf32>
      %c0_50 = arith.constant 0 : index
      %c0_51 = arith.constant 0 : index
      %109 = vector.load %arg12[%c0_50, %c0_51] : memref<1x128xf32, #tpu.memory_space<vmem>>, vector<1x128xf32>
      %110 = vector.broadcast %109 : vector<1x128xf32> to vector<8x128xf32>
      %111 = arith.addf %108, %110 : vector<8x128xf32>
      %c0_52 = arith.constant 0 : index
      %c0_53 = arith.constant 0 : index
      %c0_54 = arith.constant 0 : index
      %112 = vector.load %arg13[%c0_52, %c0_53, %c0_54] : memref<1x8x128xf32, #tpu.memory_space<vmem>>, vector<1x8x128xf32>
      %113 = vector.shape_cast %112 : vector<1x8x128xf32> to vector<8x128xf32>
      %114 = vector.shape_cast %111 : vector<8x128xf32> to vector<1x8x128xf32>
      tpu.vector_store %arg13[%c0_52, %c0_53, %c0_54], %114 {strides = array<i32>} : memref<1x8x128xf32, #tpu.memory_space<vmem>>, vector<1x8x128xf32>,
    } else {
    }
    return
  }
  func.func @transform_0(%arg0: i32, %arg1: i32) -> (i32, i32, i32) {
    %c0_i32 = arith.constant 0 : i32
    %c0_i32_0 = arith.constant 0 : i32
    return %arg0, %arg1, %c0_i32 : i32, i32, i32
  }
  func.func @transform_1(%arg0: i32, %arg1: i32) -> (i32, i32) {
    %c0_i32 = arith.constant 0 : i32
    %c0_i32_0 = arith.constant 0 : i32
    %c0_i32_1 = arith.constant 0 : i32
    return %c0_i32, %c0_i32_0 : i32, i32
  }
  func.func @transform_2(%arg0: i32, %arg1: i32) -> (i32, i32) {
    %c0_i32 = arith.constant 0 : i32
    %c0_i32_0 = arith.constant 0 : i32
    %c0_i32_1 = arith.constant 0 : i32
    return %c0_i32, %c0_i32_0 : i32, i32
  }
  func.func @transform_3(%arg0: i32, %arg1: i32) -> (i32, i32) {
    %c0_i32 = arith.constant 0 : i32
    %c0_i32_0 = arith.constant 0 : i32
    %c0_i32_1 = arith.constant 0 : i32
    return %c0_i32, %c0_i32_0 : i32, i32
  }
  func.func @transform_4(%arg0: i32, %arg1: i32) -> (i32, i32) {
    %c0_i32 = arith.constant 0 : i32
    %c0_i32_0 = arith.constant 0 : i32
    %c0_i32_1 = arith.constant 0 : i32
    return %c0_i32, %c0_i32_0 : i32, i32
  }
  func.func @transform_5(%arg0: i32, %arg1: i32) -> (i32, i32) {
    %c0_i32 = arith.constant 0 : i32
    %c0_i32_0 = arith.constant 0 : i32
    %c0_i32_1 = arith.constant 0 : i32
    return %c0_i32, %c0_i32_0 : i32, i32
  }
  func.func @transform_6(%arg0: i32, %arg1: i32) -> (i32, i32) {
    %c0_i32 = arith.constant 0 : i32
    %c0_i32_0 = arith.constant 0 : i32
    %c0_i32_1 = arith.constant 0 : i32
    return %c0_i32, %c0_i32_0 : i32, i32
  }
  func.func @transform_7(%arg0: i32, %arg1: i32) -> (i32, i32) {
    %c0_i32 = arith.constant 0 : i32
    %c0_i32_0 = arith.constant 0 : i32
    %c0_i32_1 = arith.constant 0 : i32
    return %c0_i32, %c0_i32_0 : i32, i32
  }
  func.func @transform_8(%arg0: i32, %arg1: i32) -> (i32, i32) {
    %c0_i32 = arith.constant 0 : i32
    %c0_i32_0 = arith.constant 0 : i32
    %c0_i32_1 = arith.constant 0 : i32
    return %c0_i32, %c0_i32_0 : i32, i32
  }
  func.func @transform_9(%arg0: i32, %arg1: i32) -> (i32, i32) {
    %c0_i32 = arith.constant 0 : i32
    %c0_i32_0 = arith.constant 0 : i32
    %c0_i32_1 = arith.constant 0 : i32
    return %c0_i32, %c0_i32_0 : i32, i32
  }
  func.func @transform_10(%arg0: i32, %arg1: i32) -> (i32, i32) {
    %c0_i32 = arith.constant 0 : i32
    %c0_i32_0 = arith.constant 0 : i32
    %c0_i32_1 = arith.constant 0 : i32
    return %c0_i32, %c0_i32_0 : i32, i32
  }
  func.func @transform_11(%arg0: i32, %arg1: i32) -> (i32, i32, i32) {
    %c0_i32 = arith.constant 0 : i32
    %c0_i32_0 = arith.constant 0 : i32
    %c0_i32_1 = arith.constant 0 : i32
    return %arg0, %c0_i32, %c0_i32_0 : i32, i32, i32
  }
}

</mosaic_0001>

<llo_original>
// kernel: forward.2
$region0: #{forward.2}
  #allocation0 [shape = 'u32[]', space=smem, size = 0x4, offset = 0x4, fixed_abs, tag = 'smem constant byte address 0x4 - core index']
  #allocation1 [shape = 'u32[72,128]{1,0:T(1,128)}', space=vmem, size = 0x9000, scoped, tag = 'internal scratch']
  %s0 = inlined_call_operand.vmem [shape: bf16[128,128], index: 0, kind: input, shape index: {}]
  %s1 = inlined_call_operand.vmem [shape: bf16[128,128], index: 1, kind: input, shape index: {}]
  %s2 = inlined_call_operand.vmem [shape: f32[1,128], index: 2, kind: input, shape index: {}]
  %s3 = inlined_call_operand.vmem [shape: f32[1,128], index: 3, kind: input, shape index: {}]
  %s4 = inlined_call_operand.vmem [shape: f32[1,128], index: 4, kind: input, shape index: {}]
  %s5 = inlined_call_operand.vmem [shape: bf16[128,128], index: 5, kind: output, shape index: {}]
  %s6 = sld [smem:[#allocation0]]
  $region30: #{forward.2} parent=0
    _
  %s8 = ssub.s32 1, %s6
  %s9 = scalar_select 0, %s8, %s6
  // Predicated region
  $region2: #{forward.2} parent=0 // pred_check
    _
  $region3: #{forward.2} parent=0 // pred_check_branch
    %11 = sbr.rel (0) target = $region5
  $region4: #{forward.2} parent=0 // pred_region
    _
  $region5: #{forward.2} parent=0 // pred_fallthru
    _
  // Predicated region
  $region6: #{forward.2} parent=0 // pred_check
    _
  $region7: #{forward.2} parent=0 // pred_check_branch
    %13 = sbr.rel (0) target = $region9
  $region8: #{forward.2} parent=0 // pred_region
    _
  $region9: #{forward.2} parent=0 // pred_fallthru
    _
  // Predicated region
  $region10: #{forward.2} parent=0 // pred_check
    _
  $region11: #{forward.2} parent=0 // pred_check_branch
    %15 = sbr.rel (0) target = $region13
  $region12: #{forward.2} parent=0 // pred_region
    _
  $region13: #{forward.2} parent=0 // pred_fallthru
    _
  // Predicated region
  $region14: #{forward.2} parent=0 // pred_check
    _
  $region15: #{forward.2} parent=0 // pred_check_branch
    %17 = sbr.rel (0) target = $region17
  $region16: #{forward.2} parent=0 // pred_region
    _
  $region17: #{forward.2} parent=0 // pred_fallthru
    _
  // Predicated region
  $region18: #{forward.2} parent=0 // pred_check
    _
  $region19: #{forward.2} parent=0 // pred_check_branch
    %19 = sbr.rel (0) target = $region21
  $region20: #{forward.2} parent=0 // pred_region
    _
  $region21: #{forward.2} parent=0 // pred_fallthru
    _
  %v20 = vld [vmem:[%s0] sm:$0xf]
  %v21 = vld [vmem:[%s0 + $0x4] sm:$0xf]
  %v22 = vld [vmem:[%s0 + $0x8] sm:$0xf]
  %v23 = vld [vmem:[%s0 + $0xc] sm:$0xf]
  %v24 = vld [vmem:[%s0 + $0x10] sm:$0xf]
  %v25 = vld [vmem:[%s0 + $0x14] sm:$0xf]
  %v26 = vld [vmem:[%s0 + $0x18] sm:$0xf]
  %v27 = vld [vmem:[%s0 + $0x1c] sm:$0xf]
  %v28 = vld [vmem:[%s0 + $0x20] sm:$0xf]
  %v29 = vld [vmem:[%s0 + $0x24] sm:$0xf]
  %v30 = vld [vmem:[%s0 + $0x28] sm:$0xf]
  %v31 = vld [vmem:[%s0 + $0x2c] sm:$0xf]
  %v32 = vld [vmem:[%s0 + $0x30] sm:$0xf]
  %v33 = vld [vmem:[%s0 + $0x34] sm:$0xf]
  %v34 = vld [vmem:[%s0 + $0x38] sm:$0xf]
  %v35 = vld [vmem:[%s0 + $0x3c] sm:$0xf]
  %v36 = vld [vmem:[%s1] sm:$0xf]
  %v37 = vld [vmem:[%s1 + $0x4] sm:$0xf]
  %v38 = vld [vmem:[%s1 + $0x8] sm:$0xf]
  %v39 = vld [vmem:[%s1 + $0xc] sm:$0xf]
  %v40 = vld [vmem:[%s1 + $0x10] sm:$0xf]
  %v41 = vld [vmem:[%s1 + $0x14] sm:$0xf]
  %v42 = vld [vmem:[%s1 + $0x18] sm:$0xf]
  %v43 = vld [vmem:[%s1 + $0x1c] sm:$0xf]
  %v44 = vld [vmem:[%s1 + $0x20] sm:$0xf]
  %v45 = vld [vmem:[%s1 + $0x24] sm:$0xf]
  %v46 = vld [vmem:[%s1 + $0x28] sm:$0xf]
  %v47 = vld [vmem:[%s1 + $0x2c] sm:$0xf]
  %v48 = vld [vmem:[%s1 + $0x30] sm:$0xf]
  %v49 = vld [vmem:[%s1 + $0x34] sm:$0xf]
  %v50 = vld [vmem:[%s1 + $0x38] sm:$0xf]
  %v51 = vld [vmem:[%s1 + $0x3c] sm:$0xf]
  %v52 = vld [vmem:[%s2] sm:$0x1]
  %v54 = vperm.slane %v52, 0
  %v72 = vunpack.c.l.b16 %v20
  %v73 = vunpack.c.l.b16 %v21
  %v74 = vunpack.c.l.b16 %v22
  %v75 = vunpack.c.l.b16 %v23
  %v76 = vunpack.c.l.b16 %v24
  %v77 = vunpack.c.l.b16 %v25
  %v78 = vunpack.c.l.b16 %v26
  %v79 = vunpack.c.l.b16 %v27
  %v80 = vunpack.c.l.b16 %v28
  %v81 = vunpack.c.l.b16 %v29
  %v82 = vunpack.c.l.b16 %v30
  %v83 = vunpack.c.l.b16 %v31
  %v84 = vunpack.c.l.b16 %v32
  %v85 = vunpack.c.l.b16 %v33
  %v86 = vunpack.c.l.b16 %v34
  %v87 = vunpack.c.l.b16 %v35
  %v88 = vpack.c.b16 %v73, %v72
  %v89 = vpack.c.b16 %v75, %v74
  %v90 = vpack.c.b16 %v77, %v76
  %v91 = vpack.c.b16 %v79, %v78
  %v92 = vpack.c.b16 %v81, %v80
  %v93 = vpack.c.b16 %v83, %v82
  %v94 = vpack.c.b16 %v85, %v84
  %v95 = vpack.c.b16 %v87, %v86
  %v120 = vunpack.c.l.b16 %v36
  %v121 = vunpack.c.l.b16 %v37
  %v122 = vunpack.c.l.b16 %v38
  %v123 = vunpack.c.l.b16 %v39
  %v124 = vunpack.c.l.b16 %v40
  %v125 = vunpack.c.l.b16 %v41
  %v126 = vunpack.c.l.b16 %v42
  %v127 = vunpack.c.l.b16 %v43
  %v128 = vunpack.c.l.b16 %v44
  %v129 = vunpack.c.l.b16 %v45
  %v130 = vunpack.c.l.b16 %v46
  %v131 = vunpack.c.l.b16 %v47
  %v132 = vunpack.c.l.b16 %v48
  %v133 = vunpack.c.l.b16 %v49
  %v134 = vunpack.c.l.b16 %v50
  %v135 = vunpack.c.l.b16 %v51
  %v136 = vpack.c.b16 %v121, %v120
  %v137 = vpack.c.b16 %v123, %v122
  %v138 = vpack.c.b16 %v125, %v124
  %v139 = vpack.c.b16 %v127, %v126
  %v140 = vpack.c.b16 %v129, %v128
  %v141 = vpack.c.b16 %v131, %v130
  %v142 = vpack.c.b16 %v133, %v132
  %v143 = vpack.c.b16 %v135, %v134
  %152 = vmatpush.bf16.msra.mxu0 %v143
  %153 = vmatpush.bf16.msra.mxu0 %v142
  %154 = vmatpush.bf16.msra.mxu0 %v141
  %155 = vmatpush.bf16.msra.mxu0 %v140
  %156 = vmatpush.bf16.msra.mxu0 %v139
  %157 = vmatpush.bf16.msra.mxu0 %v138
  %158 = vmatpush.bf16.msra.mxu0 %v137
  %159 = vmatpush.bf16.msra.mxu0 %v136
  %160 = vmatmul.bf16.gmra.mxu0 %v88
  %v161 = vpop.f32.mrf.mxu0
  %v162 = vadd.f32 %v54, %v161
  %v163 = vpop.f32.mrf.mxu0
  %v164 = vadd.f32 %v54, %v163
  %165 = vmatmul.bf16.gmra.mxu0 %v89
  %v166 = vpop.f32.mrf.mxu0
  %v167 = vadd.f32 %v54, %v166
  %v168 = vpop.f32.mrf.mxu0
  %v169 = vadd.f32 %v54, %v168
  %170 = vmatmul.bf16.gmra.mxu0 %v90
  %v171 = vpop.f32.mrf.mxu0
  %v172 = vadd.f32 %v54, %v171
  %v173 = vpop.f32.mrf.mxu0
  %v174 = vadd.f32 %v54, %v173
  %175 = vmatmul.bf16.gmra.mxu0 %v91
  %v176 = vpop.f32.mrf.mxu0
  %v177 = vadd.f32 %v54, %v176
  %v178 = vpop.f32.mrf.mxu0
  %v179 = vadd.f32 %v54, %v178
  %180 = vmatmul.bf16.gmra.mxu0 %v92
  %v181 = vpop.f32.mrf.mxu0
  %v182 = vadd.f32 %v54, %v181
  %v183 = vpop.f32.mrf.mxu0
  %v184 = vadd.f32 %v54, %v183
  %185 = vmatmul.bf16.gmra.mxu0 %v93
  %v186 = vpop.f32.mrf.mxu0
  %v187 = vadd.f32 %v54, %v186
  %v188 = vpop.f32.mrf.mxu0
  %v189 = vadd.f32 %v54, %v188
  %190 = vmatmul.bf16.gmra.mxu0 %v94
  %v191 = vpop.f32.mrf.mxu0
  %v192 = vadd.f32 %v54, %v191
  %v193 = vpop.f32.mrf.mxu0
  %v194 = vadd.f32 %v54, %v193
  %195 = vmatmul.bf16.gmra.mxu0 %v95
  %v196 = vpop.f32.mrf.mxu0
  %v197 = vadd.f32 %v54, %v196
  %v198 = vpop.f32.mrf.mxu0
  %v199 = vadd.f32 %v54, %v198
  %200 = vdwg.mxu0
  %v201 = vlaneseq
  %v202 = vand.u32 %v201, 127
  %vm203 = vcmp.lt.s32.totalorder %v202, 16
  %v204 = vsel %vm203, 1, 0
  %vm205 = vcmp.eq.s32.totalorder %v204, 1
  %v206 = vsel %vm205, %v162, 0.0
  %v207 = vsel %vm205, %v164, 0.0
  %v208 = vsel %vm205, %v167, 0.0
  %v209 = vsel %vm205, %v169, 0.0
  %v210 = vsel %vm205, %v172, 0.0
  %v211 = vsel %vm205, %v174, 0.0
  %v212 = vsel %vm205, %v177, 0.0
  %v213 = vsel %vm205, %v179, 0.0
  %v214 = vsel %vm205, %v182, 0.0
  %v215 = vsel %vm205, %v184, 0.0
  %v216 = vsel %vm205, %v187, 0.0
  %v217 = vsel %vm205, %v189, 0.0
  %v218 = vsel %vm205, %v192, 0.0
  %v219 = vsel %vm205, %v194, 0.0
  %v220 = vsel %vm205, %v197, 0.0
  %v221 = vsel %vm205, %v199, 0.0
  %222 = vadd.xlane.f32.xlu0 %v206
  %v223 = vpop.xlane.xlu0 %222
  %224 = vadd.xlane.f32.xlu0 %v207
  %v225 = vpop.xlane.xlu0 %224
  %226 = vadd.xlane.f32.xlu0 %v208
  %v227 = vpop.xlane.xlu0 %226
  %228 = vadd.xlane.f32.xlu0 %v209
  %v229 = vpop.xlane.xlu0 %228
  %230 = vadd.xlane.f32.xlu0 %v210
  %v231 = vpop.xlane.xlu0 %230
  %232 = vadd.xlane.f32.xlu0 %v211
  %v233 = vpop.xlane.xlu0 %232
  %234 = vadd.xlane.f32.xlu0 %v212
  %v235 = vpop.xlane.xlu0 %234
  %236 = vadd.xlane.f32.xlu0 %v213
  %v237 = vpop.xlane.xlu0 %236
  %238 = vadd.xlane.f32.xlu0 %v214
  %v239 = vpop.xlane.xlu0 %238
  %240 = vadd.xlane.f32.xlu0 %v215
  %v241 = vpop.xlane.xlu0 %240
  %242 = vadd.xlane.f32.xlu0 %v216
  %v243 = vpop.xlane.xlu0 %242
  %244 = vadd.xlane.f32.xlu0 %v217
  %v245 = vpop.xlane.xlu0 %244
  %246 = vadd.xlane.f32.xlu0 %v218
  %v247 = vpop.xlane.xlu0 %246
  %248 = vadd.xlane.f32.xlu0 %v219
  %v249 = vpop.xlane.xlu0 %248
  %250 = vadd.xlane.f32.xlu0 %v220
  %v251 = vpop.xlane.xlu0 %250
  %252 = vadd.xlane.f32.xlu0 %v221
  %v253 = vpop.xlane.xlu0 %252
  %v254 = vmul.f32 %v223, 0.0625
  %v255 = vmul.f32 %v225, 0.0625
  %v256 = vmul.f32 %v227, 0.0625
  %v257 = vmul.f32 %v229, 0.0625
  %v258 = vmul.f32 %v231, 0.0625
  %v259 = vmul.f32 %v233, 0.0625
  %v260 = vmul.f32 %v235, 0.0625
  %v261 = vmul.f32 %v237, 0.0625
  %v262 = vmul.f32 %v239, 0.0625
  %v263 = vmul.f32 %v241, 0.0625
  %v264 = vmul.f32 %v243, 0.0625
  %v265 = vmul.f32 %v245, 0.0625
  %v266 = vmul.f32 %v247, 0.0625
  %v267 = vmul.f32 %v249, 0.0625
  %v268 = vmul.f32 %v251, 0.0625
  %v269 = vmul.f32 %v253, 0.0625
  %v270 = vsub.f32 %v162, %v254
  %v271 = vsub.f32 %v164, %v255
  %v272 = vsub.f32 %v167, %v256
  %v273 = vsub.f32 %v169, %v257
  %v274 = vsub.f32 %v172, %v258
  %v275 = vsub.f32 %v174, %v259
  %v276 = vsub.f32 %v177, %v260
  %v277 = vsub.f32 %v179, %v261
  %v278 = vsub.f32 %v182, %v262
  %v279 = vsub.f32 %v184, %v263
  %v280 = vsub.f32 %v187, %v264
  %v281 = vsub.f32 %v189, %v265
  %v282 = vsub.f32 %v192, %v266
  %v283 = vsub.f32 %v194, %v267
  %v284 = vsub.f32 %v197, %v268
  %v285 = vsub.f32 %v199, %v269
  %v286 = vsel %vm205, %v270, 0.0
  %v287 = vsel %vm205, %v271, 0.0
  %v288 = vsel %vm205, %v272, 0.0
  %v289 = vsel %vm205, %v273, 0.0
  %v290 = vsel %vm205, %v274, 0.0
  %v291 = vsel %vm205, %v275, 0.0
  %v292 = vsel %vm205, %v276, 0.0
  %v293 = vsel %vm205, %v277, 0.0
  %v294 = vsel %vm205, %v278, 0.0
  %v295 = vsel %vm205, %v279, 0.0
  %v296 = vsel %vm205, %v280, 0.0
  %v297 = vsel %vm205, %v281, 0.0
  %v298 = vsel %vm205, %v282, 0.0
  %v299 = vsel %vm205, %v283, 0.0
  %v300 = vsel %vm205, %v284, 0.0
  %v301 = vsel %vm205, %v285, 0.0
  %v302 = vmul.f32 %v286, %v286
  %v303 = vmul.f32 %v287, %v287
  %v304 = vmul.f32 %v288, %v288
  %v305 = vmul.f32 %v289, %v289
  %v306 = vmul.f32 %v290, %v290
  %v307 = vmul.f32 %v291, %v291
  %v308 = vmul.f32 %v292, %v292
  %v309 = vmul.f32 %v293, %v293
  %v310 = vmul.f32 %v294, %v294
  %v311 = vmul.f32 %v295, %v295
  %v312 = vmul.f32 %v296, %v296
  %v313 = vmul.f32 %v297, %v297
  %v314 = vmul.f32 %v298, %v298
  %v315 = vmul.f32 %v299, %v299
  %v316 = vmul.f32 %v300, %v300
  %v317 = vmul.f32 %v301, %v301
  %318 = vadd.xlane.f32.xlu0 %v302
  %v319 = vpop.xlane.xlu0 %318
  %320 = vadd.xlane.f32.xlu0 %v303
  %v321 = vpop.xlane.xlu0 %320
  %322 = vadd.xlane.f32.xlu0 %v304
  %v323 = vpop.xlane.xlu0 %322
  %324 = vadd.xlane.f32.xlu0 %v305
  %v325 = vpop.xlane.xlu0 %324
  %326 = vadd.xlane.f32.xlu0 %v306
  %v327 = vpop.xlane.xlu0 %326
  %328 = vadd.xlane.f32.xlu0 %v307
  %v329 = vpop.xlane.xlu0 %328
  %330 = vadd.xlane.f32.xlu0 %v308
  %v331 = vpop.xlane.xlu0 %330
  %332 = vadd.xlane.f32.xlu0 %v309
  %v333 = vpop.xlane.xlu0 %332
  %334 = vadd.xlane.f32.xlu0 %v310
  %v335 = vpop.xlane.xlu0 %334
  %336 = vadd.xlane.f32.xlu0 %v311
  %v337 = vpop.xlane.xlu0 %336
  %338 = vadd.xlane.f32.xlu0 %v312
  %v339 = vpop.xlane.xlu0 %338
  %340 = vadd.xlane.f32.xlu0 %v313
  %v341 = vpop.xlane.xlu0 %340
  %342 = vadd.xlane.f32.xlu0 %v314
  %v343 = vpop.xlane.xlu0 %342
  %344 = vadd.xlane.f32.xlu0 %v315
  %v345 = vpop.xlane.xlu0 %344
  %346 = vadd.xlane.f32.xlu0 %v316
  %v347 = vpop.xlane.xlu0 %346
  %348 = vadd.xlane.f32.xlu0 %v317
  %v349 = vpop.xlane.xlu0 %348
  %v350 = vmul.f32 %v319, 0.0625
  %v351 = vmul.f32 %v321, 0.0625
  %v352 = vmul.f32 %v323, 0.0625
  %v353 = vmul.f32 %v325, 0.0625
  %v354 = vmul.f32 %v327, 0.0625
  %v355 = vmul.f32 %v329, 0.0625
  %v356 = vmul.f32 %v331, 0.0625
  %v357 = vmul.f32 %v333, 0.0625
  %v358 = vmul.f32 %v335, 0.0625
  %v359 = vmul.f32 %v337, 0.0625
  %v360 = vmul.f32 %v339, 0.0625
  %v361 = vmul.f32 %v341, 0.0625
  %v362 = vmul.f32 %v343, 0.0625
  %v363 = vmul.f32 %v345, 0.0625
  %v364 = vmul.f32 %v347, 0.0625
  %v365 = vmul.f32 %v349, 0.0625
  %v366 = vadd.f32 %v350, 1e-06
  %v367 = vadd.f32 %v351, 1e-06
  %v368 = vadd.f32 %v352, 1e-06
  %v369 = vadd.f32 %v353, 1e-06
  %v370 = vadd.f32 %v354, 1e-06
  %v371 = vadd.f32 %v355, 1e-06
  %v372 = vadd.f32 %v356, 1e-06
  %v373 = vadd.f32 %v357, 1e-06
  %v374 = vadd.f32 %v358, 1e-06
  %v375 = vadd.f32 %v359, 1e-06
  %v376 = vadd.f32 %v360, 1e-06
  %v377 = vadd.f32 %v361, 1e-06
  %v378 = vadd.f32 %v362, 1e-06
  %v379 = vadd.f32 %v363, 1e-06
  %v380 = vadd.f32 %v364, 1e-06
  %v381 = vadd.f32 %v365, 1e-06
  %v382 = vrsqrt.pop %v366
  %v383 = vmul.f32 %v382, %v366
  %v384 = vmul.f32 %v383, %v382
  %v385 = vmul.f32 0.5, %v384
  %v386 = vsub.f32 1.5, %v385
  %v387 = vmul.f32 %v382, %v386
  %vm388 = vweird.f32 %v366
  %vm389 = vweird.f32 %v382
  %vm390 = vmor %vm388, %vm389
  %v391 = vsel %vm390, %v382, %v387
  %v392 = vrsqrt.pop %v367
  %v393 = vmul.f32 %v392, %v367
  %v394 = vmul.f32 %v393, %v392
  %v395 = vmul.f32 0.5, %v394
  %v396 = vsub.f32 1.5, %v395
  %v397 = vmul.f32 %v392, %v396
  %vm398 = vweird.f32 %v367
  %vm399 = vweird.f32 %v392
  %vm400 = vmor %vm398, %vm399
  %v401 = vsel %vm400, %v392, %v397
  %v402 = vrsqrt.pop %v368
  %v403 = vmul.f32 %v402, %v368
  %v404 = vmul.f32 %v403, %v402
  %v405 = vmul.f32 0.5, %v404
  %v406 = vsub.f32 1.5, %v405
  %v407 = vmul.f32 %v402, %v406
  %vm408 = vweird.f32 %v368
  %vm409 = vweird.f32 %v402
  %vm410 = vmor %vm408, %vm409
  %v411 = vsel %vm410, %v402, %v407
  %v412 = vrsqrt.pop %v369
  %v413 = vmul.f32 %v412, %v369
  %v414 = vmul.f32 %v413, %v412
  %v415 = vmul.f32 0.5, %v414
  %v416 = vsub.f32 1.5, %v415
  %v417 = vmul.f32 %v412, %v416
  %vm418 = vweird.f32 %v369
  %vm419 = vweird.f32 %v412
  %vm420 = vmor %vm418, %vm419
  %v421 = vsel %vm420, %v412, %v417
  %v422 = vrsqrt.pop %v370
  %v423 = vmul.f32 %v422, %v370
  %v424 = vmul.f32 %v423, %v422
  %v425 = vmul.f32 0.5, %v424
  %v426 = vsub.f32 1.5, %v425
  %v427 = vmul.f32 %v422, %v426
  %vm428 = vweird.f32 %v370
  %vm429 = vweird.f32 %v422
  %vm430 = vmor %vm428, %vm429
  %v431 = vsel %vm430, %v422, %v427
  %v432 = vrsqrt.pop %v371
  %v433 = vmul.f32 %v432, %v371
  %v434 = vmul.f32 %v433, %v432
  %v435 = vmul.f32 0.5, %v434
  %v436 = vsub.f32 1.5, %v435
  %v437 = vmul.f32 %v432, %v436
  %vm438 = vweird.f32 %v371
  %vm439 = vweird.f32 %v432
  %vm440 = vmor %vm438, %vm439
  %v441 = vsel %vm440, %v432, %v437
  %v442 = vrsqrt.pop %v372
  %v443 = vmul.f32 %v442, %v372
  %v444 = vmul.f32 %v443, %v442
  %v445 = vmul.f32 0.5, %v444
  %v446 = vsub.f32 1.5, %v445
  %v447 = vmul.f32 %v442, %v446
  %vm448 = vweird.f32 %v372
  %vm449 = vweird.f32 %v442
  %vm450 = vmor %vm448, %vm449
  %v451 = vsel %vm450, %v442, %v447
  %v452 = vrsqrt.pop %v373
  %v453 = vmul.f32 %v452, %v373
  %v454 = vmul.f32 %v453, %v452
  %v455 = vmul.f32 0.5, %v454
  %v456 = vsub.f32 1.5, %v455
  %v457 = vmul.f32 %v452, %v456
  %vm458 = vweird.f32 %v373
  %vm459 = vweird.f32 %v452
  %vm460 = vmor %vm458, %vm459
  %v461 = vsel %vm460, %v452, %v457
  %v462 = vrsqrt.pop %v374
  %v463 = vmul.f32 %v462, %v374
  %v464 = vmul.f32 %v463, %v462
  %v465 = vmul.f32 0.5, %v464
  %v466 = vsub.f32 1.5, %v465
  %v467 = vmul.f32 %v462, %v466
  %vm468 = vweird.f32 %v374
  %vm469 = vweird.f32 %v462
  %vm470 = vmor %vm468, %vm469
  %v471 = vsel %vm470, %v462, %v467
  %v472 = vrsqrt.pop %v375
  %v473 = vmul.f32 %v472, %v375
  %v474 = vmul.f32 %v473, %v472
  %v475 = vmul.f32 0.5, %v474
  %v476 = vsub.f32 1.5, %v475
  %v477 = vmul.f32 %v472, %v476
  %vm478 = vweird.f32 %v375
  %vm479 = vweird.f32 %v472
  %vm480 = vmor %vm478, %vm479
  %v481 = vsel %vm480, %v472, %v477
  %v482 = vrsqrt.pop %v376
  %v483 = vmul.f32 %v482, %v376
  %v484 = vmul.f32 %v483, %v482
  %v485 = vmul.f32 0.5, %v484
  %v486 = vsub.f32 1.5, %v485
  %v487 = vmul.f32 %v482, %v486
  %vm488 = vweird.f32 %v376
  %vm489 = vweird.f32 %v482
  %vm490 = vmor %vm488, %vm489
  %v491 = vsel %vm490, %v482, %v487
  %v492 = vrsqrt.pop %v377
  %v493 = vmul.f32 %v492, %v377
  %v494 = vmul.f32 %v493, %v492
  %v495 = vmul.f32 0.5, %v494
  %v496 = vsub.f32 1.5, %v495
  %v497 = vmul.f32 %v492, %v496
  %vm498 = vweird.f32 %v377
  %vm499 = vweird.f32 %v492
  %vm500 = vmor %vm498, %vm499
  %v501 = vsel %vm500, %v492, %v497
  %v502 = vrsqrt.pop %v378
  %v503 = vmul.f32 %v502, %v378
  %v504 = vmul.f32 %v503, %v502
  %v505 = vmul.f32 0.5, %v504
  %v506 = vsub.f32 1.5, %v505
  %v507 = vmul.f32 %v502, %v506
  %vm508 = vweird.f32 %v378
  %vm509 = vweird.f32 %v502
  %vm510 = vmor %vm508, %vm509
  %v511 = vsel %vm510, %v502, %v507
  %v512 = vrsqrt.pop %v379
  %v513 = vmul.f32 %v512, %v379
  %v514 = vmul.f32 %v513, %v512
  %v515 = vmul.f32 0.5, %v514
  %v516 = vsub.f32 1.5, %v515
  %v517 = vmul.f32 %v512, %v516
  %vm518 = vweird.f32 %v379
  %vm519 = vweird.f32 %v512
  %vm520 = vmor %vm518, %vm519
  %v521 = vsel %vm520, %v512, %v517
  %v522 = vrsqrt.pop %v380
  %v523 = vmul.f32 %v522, %v380
  %v524 = vmul.f32 %v523, %v522
  %v525 = vmul.f32 0.5, %v524
  %v526 = vsub.f32 1.5, %v525
  %v527 = vmul.f32 %v522, %v526
  %vm528 = vweird.f32 %v380
  %vm529 = vweird.f32 %v522
  %vm530 = vmor %vm528, %vm529
  %v531 = vsel %vm530, %v522, %v527
  %v532 = vrsqrt.pop %v381
  %v533 = vmul.f32 %v532, %v381
  %v534 = vmul.f32 %v533, %v532
  %v535 = vmul.f32 0.5, %v534
  %v536 = vsub.f32 1.5, %v535
  %v537 = vmul.f32 %v532, %v536
  %vm538 = vweird.f32 %v381
  %vm539 = vweird.f32 %v532
  %vm540 = vmor %vm538, %vm539
  %v541 = vsel %vm540, %v532, %v537
  %v542 = vmul.f32 %v270, %v391
  %v543 = vmul.f32 %v271, %v401
  %v544 = vmul.f32 %v272, %v411
  %v545 = vmul.f32 %v273, %v421
  %v546 = vmul.f32 %v274, %v431
  %v547 = vmul.f32 %v275, %v441
  %v548 = vmul.f32 %v276, %v451
  %v549 = vmul.f32 %v277, %v461
  %v550 = vmul.f32 %v278, %v471
  %v551 = vmul.f32 %v279, %v481
  %v552 = vmul.f32 %v280, %v491
  %v553 = vmul.f32 %v281, %v501
  %v554 = vmul.f32 %v282, %v511
  %v555 = vmul.f32 %v283, %v521
  %v556 = vmul.f32 %v284, %v531
  %v557 = vmul.f32 %v285, %v541
  %v558 = vld [vmem:[%s3] sm:$0x1]
  %v560 = vperm.slane %v558, 0
  %v562 = vmul.f32 %v542, %v560
  %v563 = vmul.f32 %v543, %v560
  %v564 = vmul.f32 %v544, %v560
  %v565 = vmul.f32 %v545, %v560
  %v566 = vmul.f32 %v546, %v560
  %v567 = vmul.f32 %v547, %v560
  %v568 = vmul.f32 %v548, %v560
  %v569 = vmul.f32 %v549, %v560
  %v570 = vmul.f32 %v550, %v560
  %v571 = vmul.f32 %v551, %v560
  %v572 = vmul.f32 %v552, %v560
  %v573 = vmul.f32 %v553, %v560
  %v574 = vmul.f32 %v554, %v560
  %v575 = vmul.f32 %v555, %v560
  %v576 = vmul.f32 %v556, %v560
  %v577 = vmul.f32 %v557, %v560
  %v578 = vld [vmem:[%s4] sm:$0x1]
  %v580 = vperm.slane %v578, 0
  %v582 = vadd.f32 %v562, %v580
  %v583 = vadd.f32 %v563, %v580
  %v584 = vadd.f32 %v564, %v580
  %v585 = vadd.f32 %v565, %v580
  %v586 = vadd.f32 %v566, %v580
  %v587 = vadd.f32 %v567, %v580
  %v588 = vadd.f32 %v568, %v580
  %v589 = vadd.f32 %v569, %v580
  %v590 = vadd.f32 %v570, %v580
  %v591 = vadd.f32 %v571, %v580
  %v592 = vadd.f32 %v572, %v580
  %v593 = vadd.f32 %v573, %v580
  %v594 = vadd.f32 %v574, %v580
  %v595 = vadd.f32 %v575, %v580
  %v596 = vadd.f32 %v576, %v580
  %v597 = vadd.f32 %v577, %v580
  %v598 = vpack.c.bf16 %v582, %v582
  %v599 = vpack.c.bf16 %v583, %v583
  %v600 = vpack.c.bf16 %v584, %v584
  %v601 = vpack.c.bf16 %v585, %v585
  %v602 = vpack.c.bf16 %v586, %v586
  %v603 = vpack.c.bf16 %v587, %v587
  %v604 = vpack.c.bf16 %v588, %v588
  %v605 = vpack.c.bf16 %v589, %v589
  %v606 = vpack.c.bf16 %v590, %v590
  %v607 = vpack.c.bf16 %v591, %v591
  %v608 = vpack.c.bf16 %v592, %v592
  %v609 = vpack.c.bf16 %v593, %v593
  %v610 = vpack.c.bf16 %v594, %v594
  %v611 = vpack.c.bf16 %v595, %v595
  %v612 = vpack.c.bf16 %v596, %v596
  %v613 = vpack.c.bf16 %v597, %v597
  %614 = vst [vmem:[%s5] sm:$0xf] %v598
  %615 = vst [vmem:[%s5 + $0x4] sm:$0xf] %v599
  %616 = vst [vmem:[%s5 + $0x8] sm:$0xf] %v600
  %617 = vst [vmem:[%s5 + $0xc] sm:$0xf] %v601
  %618 = vst [vmem:[%s5 + $0x10] sm:$0xf] %v602
  %619 = vst [vmem:[%s5 + $0x14] sm:$0xf] %v603
  %620 = vst [vmem:[%s5 + $0x18] sm:$0xf] %v604
  %621 = vst [vmem:[%s5 + $0x1c] sm:$0xf] %v605
  %622 = vst [vmem:[%s5 + $0x20] sm:$0xf] %v606
  %623 = vst [vmem:[%s5 + $0x24] sm:$0xf] %v607
  %624 = vst [vmem:[%s5 + $0x28] sm:$0xf] %v608
  %625 = vst [vmem:[%s5 + $0x2c] sm:$0xf] %v609
  %626 = vst [vmem:[%s5 + $0x30] sm:$0xf] %v610
  %627 = vst [vmem:[%s5 + $0x34] sm:$0xf] %v611
  %628 = vst [vmem:[%s5 + $0x38] sm:$0xf] %v612
  %629 = vst [vmem:[%s5 + $0x3c] sm:$0xf] %v613
  // Predicated region
  $region22: #{forward.2} parent=0 // pred_check
    _
  $region23: #{forward.2} parent=0 // pred_check_branch
    %631 = sbr.rel (0) target = $region25
  $region24: #{forward.2} parent=0 // pred_region
    _
  $region25: #{forward.2} parent=0 // pred_fallthru
    _
  // Predicated region
  $region26: #{forward.2} parent=0 // pred_check
    _
  $region27: #{forward.2} parent=0 // pred_check_branch
    %633 = sbr.rel (0) target = $region29
  $region28: #{forward.2} parent=0 // pred_region
    _
  $region29: #{forward.2} parent=0 // pred_fallthru
    _

// kernel: forward.3
$region0: #{forward.3}
  #allocation0 [shape = 'u32[]', space=smem, size = 0x4, offset = 0x4, fixed_abs, tag = 'smem constant byte address 0x4 - core index']
  #allocation1 [shape = 'u32[72,128]{1,0:T(1,128)}', space=vmem, size = 0x9000, scoped, tag = 'internal scratch']
  #allocation2 [shape = 'f32[8,128]{1,0:T(8,128)}', space=vmem, size = 0x1000, scoped, tag = 'scratch operand']
  %s0 = inlined_call_operand.vmem [shape: bf16[2,16,256], index: 0, kind: input, shape index: {}]
  %s1 = inlined_call_operand.vmem [shape: bf16[256,128], index: 1, kind: input, shape index: {}]
  %s2 = inlined_call_operand.vmem [shape: f32[1,128], index: 2, kind: input, shape index: {}]
  %s3 = inlined_call_operand.vmem [shape: f32[1,128], index: 3, kind: input, shape index: {}]
  %s4 = inlined_call_operand.vmem [shape: f32[1,128], index: 4, kind: input, shape index: {}]
  %s5 = inlined_call_operand.vmem [shape: bf16[128,128], index: 5, kind: input, shape index: {}]
  %s6 = inlined_call_operand.vmem [shape: f32[1,128], index: 6, kind: input, shape index: {}]
  %s7 = inlined_call_operand.vmem [shape: f32[1,128], index: 7, kind: input, shape index: {}]
  %s8 = inlined_call_operand.vmem [shape: f32[1,128], index: 8, kind: input, shape index: {}]
  %s9 = inlined_call_operand.vmem [shape: f32[128,128], index: 9, kind: input, shape index: {}]
  %s10 = inlined_call_operand.vmem [shape: f32[1,128], index: 10, kind: input, shape index: {}]
  %s11 = inlined_call_operand.vmem [shape: f32[2,8,128], index: 11, kind: output, shape index: {}]
  %s12 = sld [smem:[#allocation0]]
  $region85: #{forward.3} parent=0
    _
  %s14 = ssub.s32 1, %s12
  %s15 = scalar_select 0, %s14, %s12
  loop: start=0, step=1, limit=4
  $region2: #{forward.3} parent=0 // loop_pre_header
    _
  $region3: #{forward.3} parent=0 // loop_header
    %s17 = sphi 0, %s21
    %p18 = scmp.ge.s32.totalorder %s17, 4
    %s24 = sphi 0, %s36
    %s25 = sphi 0, %s32
    %s26 = sphi 0, %s24
    %s27 = sphi 0, %s25
    %s28 = sphi 0, %s26
    %s29 = sphi 0, %s27
    %s41 = sphi 0, %s43
    %s44 = sphi 0, %s41
    %s45 = sphi 0, %s44
    %s61 = sphi 0, %s45
    %s65 = sphi 0, %s65
    %s67 = sphi 0, %s65
    %s68 = sphi 0, %s67
    %s82 = sphi 0, %s68
    %s86 = sphi 0, %s86
    %s88 = sphi 0, %s86
    %s89 = sphi 0, %s88
    %s103 = sphi 0, %s89
    %s107 = sphi 0, %s107
    %s109 = sphi 0, %s107
    %s110 = sphi 0, %s109
    %s124 = sphi 0, %s110
    %s128 = sphi 0, %s128
    %s130 = sphi 0, %s128
    %s131 = sphi 0, %s130
    %s145 = sphi 0, %s131
    %s149 = sphi 0, %s149
    %s151 = sphi 0, %s149
    %s152 = sphi 0, %s151
    %s166 = sphi 0, %s152
    %s170 = sphi 0, %s170
    %s172 = sphi 0, %s170
    %s173 = sphi 0, %s172
    %s187 = sphi 0, %s173
    %s191 = sphi 0, %s191
    %s193 = sphi 0, %s191
    %s194 = sphi 0, %s193
    %s208 = sphi 0, %s194
    %s212 = sphi 0, %s212
    %s214 = sphi 0, %s212
    %s215 = sphi 0, %s214
    %s229 = sphi 0, %s215
    %s233 = sphi 0, %s233
    %s235 = sphi 0, %s233
    %s236 = sphi 0, %s235
    %s250 = sphi 0, %s236
    %s254 = sphi 0, %s254
    %s256 = sphi 0, %s254
    %s257 = sphi 0, %s256
    %s271 = sphi 0, %s257
    %s277 = sphi 0, %s279
    %s280 = sphi 0, %s277
    %s281 = sphi 0, %s280
    %s297 = sphi 0, %s281
  $region4: #{forward.3} parent=0 // loop_header_branch
    %20 = sbr.rel (%p18) target = $region8
  $region5: #{forward.3} parent=0 // loop_body
    %s22 = ssub.s32 %s17, 1
    %s23 = ssub.s32 %s17, 2
    %s30 = sadd.s32 1, %s25
    %p31 = scmp.ge.s32.totalorder %s30, 1
    %s32 = scalar_select %p31, 0, %s30
    %s33 = sadd.s32 1, %s24
    %s34 = scalar_select %p31, %s33, %s24
    %p35 = scmp.ge.s32.totalorder %s34, 2
    %s36 = scalar_select %p35, 0, %s34
    %s37 = ssub.s32 %s24, %s36
    %s38 = ssub.s32 %s25, %s32
    %s39 = sor.u32 %s37, %s38
    %p40 = scmp.eq.s32.totalorder %s39, 0
    %s42 = sadd.s32 %s41, 1
    %s43 = scalar_select %p40, %s41, %s42
    %p46 = pneg %p40
    %p47 = scmp.eq.s32.totalorder %s17, 1
    %p48 = por %p46, %p47
    %p49 = scmp.ne.s32.totalorder %s41, %s44
    %p50 = scmp.eq.s32.totalorder %s17, 0
    %p51 = por %p49, %p50
    %p52 = scmp.ne.s32.totalorder %s41, %s44
    %p53 = scmp.eq.s32.totalorder %s22, 1
    %p54 = por %p52, %p53
    %p55 = scmp.ne.s32.totalorder %s44, %s45
    %p56 = scmp.eq.s32.totalorder %s22, 0
    %p57 = por %p55, %p56
    %p58 = scmp.ne.s32.totalorder %s44, %s45
    %p59 = scmp.eq.s32.totalorder %s23, 1
    %p60 = por %p58, %p59
    %p62 = scmp.ne.s32.totalorder %s45, %s61
    %p63 = scmp.eq.s32.totalorder %s23, 0
    %p64 = por %p62, %p63
    %s66 = sadd.s32 %s65, 1
    %p69 = scmp.eq.s32.totalorder %s17, 1
    %p70 = scmp.ne.s32.totalorder %s65, %s67
    %p71 = scmp.eq.s32.totalorder %s17, 0
    %p72 = por %p70, %p71
    %p73 = scmp.ne.s32.totalorder %s65, %s67
    %p74 = scmp.eq.s32.totalorder %s22, 1
    %p75 = por %p73, %p74
    %p76 = scmp.ne.s32.totalorder %s67, %s68
    %p77 = scmp.eq.s32.totalorder %s22, 0
    %p78 = por %p76, %p77
    %p79 = scmp.ne.s32.totalorder %s67, %s68
    %p80 = scmp.eq.s32.totalorder %s23, 1
    %p81 = por %p79, %p80
    %p83 = scmp.ne.s32.totalorder %s68, %s82
    %p84 = scmp.eq.s32.totalorder %s23, 0
    %p85 = por %p83, %p84
    %s87 = sadd.s32 %s86, 1
    %p90 = scmp.eq.s32.totalorder %s17, 1
    %p91 = scmp.ne.s32.totalorder %s86, %s88
    %p92 = scmp.eq.s32.totalorder %s17, 0
    %p93 = por %p91, %p92
    %p94 = scmp.ne.s32.totalorder %s86, %s88
    %p95 = scmp.eq.s32.totalorder %s22, 1
    %p96 = por %p94, %p95
    %p97 = scmp.ne.s32.totalorder %s88, %s89
    %p98 = scmp.eq.s32.totalorder %s22, 0
    %p99 = por %p97, %p98
    %p100 = scmp.ne.s32.totalorder %s88, %s89
    %p101 = scmp.eq.s32.totalorder %s23, 1
    %p102 = por %p100, %p101
    %p104 = scmp.ne.s32.totalorder %s89, %s103
    %p105 = scmp.eq.s32.totalorder %s23, 0
    %p106 = por %p104, %p105
    %s108 = sadd.s32 %s107, 1
    %p111 = scmp.eq.s32.totalorder %s17, 1
    %p112 = scmp.ne.s32.totalorder %s107, %s109
    %p113 = scmp.eq.s32.totalorder %s17, 0
    %p114 = por %p112, %p113
    %p115 = scmp.ne.s32.totalorder %s107, %s109
    %p116 = scmp.eq.s32.totalorder %s22, 1
    %p117 = por %p115, %p116
    %p118 = scmp.ne.s32.totalorder %s109, %s110
    %p119 = scmp.eq.s32.totalorder %s22, 0
    %p120 = por %p118, %p119
    %p121 = scmp.ne.s32.totalorder %s109, %s110
    %p122 = scmp.eq.s32.totalorder %s23, 1
    %p123 = por %p121, %p122
    %p125 = scmp.ne.s32.totalorder %s110, %s124
    %p126 = scmp.eq.s32.totalorder %s23, 0
    %p127 = por %p125, %p126
    %s129 = sadd.s32 %s128, 1
    %p132 = scmp.eq.s32.totalorder %s17, 1
    %p133 = scmp.ne.s32.totalorder %s128, %s130
    %p134 = scmp.eq.s32.totalorder %s17, 0
    %p135 = por %p133, %p134
    %p136 = scmp.ne.s32.totalorder %s128, %s130
    %p137 = scmp.eq.s32.totalorder %s22, 1
    %p138 = por %p136, %p137
    %p139 = scmp.ne.s32.totalorder %s130, %s131
    %p140 = scmp.eq.s32.totalorder %s22, 0
    %p141 = por %p139, %p140
    %p142 = scmp.ne.s32.totalorder %s130, %s131
    %p143 = scmp.eq.s32.totalorder %s23, 1
    %p144 = por %p142, %p143
    %p146 = scmp.ne.s32.totalorder %s131, %s145
    %p147 = scmp.eq.s32.totalorder %s23, 0
    %p148 = por %p146, %p147
    %s150 = sadd.s32 %s149, 1
    %p153 = scmp.eq.s32.totalorder %s17, 1
    %p154 = scmp.ne.s32.totalorder %s149, %s151
    %p155 = scmp.eq.s32.totalorder %s17, 0
    %p156 = por %p154, %p155
    %p157 = scmp.ne.s32.totalorder %s149, %s151
    %p158 = scmp.eq.s32.totalorder %s22, 1
    %p159 = por %p157, %p158
    %p160 = scmp.ne.s32.totalorder %s151, %s152
    %p161 = scmp.eq.s32.totalorder %s22, 0
    %p162 = por %p160, %p161
    %p163 = scmp.ne.s32.totalorder %s151, %s152
    %p164 = scmp.eq.s32.totalorder %s23, 1
    %p165 = por %p163, %p164
    %p167 = scmp.ne.s32.totalorder %s152, %s166
    %p168 = scmp.eq.s32.totalorder %s23, 0
    %p169 = por %p167, %p168
    %s171 = sadd.s32 %s170, 1
    %p174 = scmp.eq.s32.totalorder %s17, 1
    %p175 = scmp.ne.s32.totalorder %s170, %s172
    %p176 = scmp.eq.s32.totalorder %s17, 0
    %p177 = por %p175, %p176
    %p178 = scmp.ne.s32.totalorder %s170, %s172
    %p179 = scmp.eq.s32.totalorder %s22, 1
    %p180 = por %p178, %p179
    %p181 = scmp.ne.s32.totalorder %s172, %s173
    %p182 = scmp.eq.s32.totalorder %s22, 0
    %p183 = por %p181, %p182
    %p184 = scmp.ne.s32.totalorder %s172, %s173
    %p185 = scmp.eq.s32.totalorder %s23, 1
    %p186 = por %p184, %p185
    %p188 = scmp.ne.s32.totalorder %s173, %s187
    %p189 = scmp.eq.s32.totalorder %s23, 0
    %p190 = por %p188, %p189
    %s192 = sadd.s32 %s191, 1
    %p195 = scmp.eq.s32.totalorder %s17, 1
    %p196 = scmp.ne.s32.totalorder %s191, %s193
    %p197 = scmp.eq.s32.totalorder %s17, 0
    %p198 = por %p196, %p197
    %p199 = scmp.ne.s32.totalorder %s191, %s193
    %p200 = scmp.eq.s32.totalorder %s22, 1
    %p201 = por %p199, %p200
    %p202 = scmp.ne.s32.totalorder %s193, %s194
    %p203 = scmp.eq.s32.totalorder %s22, 0
    %p204 = por %p202, %p203
    %p205 = scmp.ne.s32.totalorder %s193, %s194
    %p206 = scmp.eq.s32.totalorder %s23, 1
    %p207 = por %p205, %p206
    %p209 = scmp.ne.s32.totalorder %s194, %s208
    %p210 = scmp.eq.s32.totalorder %s23, 0
    %p211 = por %p209, %p210
    %s213 = sadd.s32 %s212, 1
    %p216 = scmp.eq.s32.totalorder %s17, 1
    %p217 = scmp.ne.s32.totalorder %s212, %s214
    %p218 = scmp.eq.s32.totalorder %s17, 0
    %p219 = por %p217, %p218
    %p220 = scmp.ne.s32.totalorder %s212, %s214
    %p221 = scmp.eq.s32.totalorder %s22, 1
    %p222 = por %p220, %p221
    %p223 = scmp.ne.s32.totalorder %s214, %s215
    %p224 = scmp.eq.s32.totalorder %s22, 0
    %p225 = por %p223, %p224
    %p226 = scmp.ne.s32.totalorder %s214, %s215
    %p227 = scmp.eq.s32.totalorder %s23, 1
    %p228 = por %p226, %p227
    %p230 = scmp.ne.s32.totalorder %s215, %s229
    %p231 = scmp.eq.s32.totalorder %s23, 0
    %p232 = por %p230, %p231
    %s234 = sadd.s32 %s233, 1
    %p237 = scmp.eq.s32.totalorder %s17, 1
    %p238 = scmp.ne.s32.totalorder %s233, %s235
    %p239 = scmp.eq.s32.totalorder %s17, 0
    %p240 = por %p238, %p239
    %p241 = scmp.ne.s32.totalorder %s233, %s235
    %p242 = scmp.eq.s32.totalorder %s22, 1
    %p243 = por %p241, %p242
    %p244 = scmp.ne.s32.totalorder %s235, %s236
    %p245 = scmp.eq.s32.totalorder %s22, 0
    %p246 = por %p244, %p245
    %p247 = scmp.ne.s32.totalorder %s235, %s236
    %p248 = scmp.eq.s32.totalorder %s23, 1
    %p249 = por %p247, %p248
    %p251 = scmp.ne.s32.totalorder %s236, %s250
    %p252 = scmp.eq.s32.totalorder %s23, 0
    %p253 = por %p251, %p252
    %s255 = sadd.s32 %s254, 1
    %p258 = scmp.eq.s32.totalorder %s17, 1
    %p259 = scmp.ne.s32.totalorder %s254, %s256
    %p260 = scmp.eq.s32.totalorder %s17, 0
    %p261 = por %p259, %p260
    %p262 = scmp.ne.s32.totalorder %s254, %s256
    %p263 = scmp.eq.s32.totalorder %s22, 1
    %p264 = por %p262, %p263
    %p265 = scmp.ne.s32.totalorder %s256, %s257
    %p266 = scmp.eq.s32.totalorder %s22, 0
    %p267 = por %p265, %p266
    %p268 = scmp.ne.s32.totalorder %s256, %s257
    %p269 = scmp.eq.s32.totalorder %s23, 1
    %p270 = por %p268, %p269
    %p272 = scmp.ne.s32.totalorder %s257, %s271
    %p273 = scmp.eq.s32.totalorder %s23, 0
    %p274 = por %p272, %p273
    %s275 = ssub.s32 %s24, %s36
    %p276 = scmp.eq.s32.totalorder %s275, 0
    %s278 = sadd.s32 %s277, 1
    %s279 = scalar_select %p276, %s277, %s278
    %p282 = pneg %p276
    %p283 = scmp.eq.s32.totalorder %s17, 1
    %p284 = por %p282, %p283
    %p285 = scmp.ne.s32.totalorder %s277, %s280
    %p286 = scmp.eq.s32.totalorder %s17, 0
    %p287 = por %p285, %p286
    %p288 = scmp.ne.s32.totalorder %s277, %s280
    %p289 = scmp.eq.s32.totalorder %s22, 1
    %p290 = por %p288, %p289
    %p291 = scmp.ne.s32.totalorder %s280, %s281
    %p292 = scmp.eq.s32.totalorder %s22, 0
    %p293 = por %p291, %p292
    %p294 = scmp.ne.s32.totalorder %s280, %s281
    %p295 = scmp.eq.s32.totalorder %s23, 1
    %p296 = por %p294, %p295
    %p298 = scmp.ne.s32.totalorder %s281, %s297
    %p299 = scmp.eq.s32.totalorder %s23, 0
    %p300 = por %p298, %p299
    %p301 = scmp.le.s32.totalorder 1, %s17
    %p302 = scmp.lt.s32.totalorder %s17, 3
    %p303 = pnand %p301, %p302
    %p304 = pneg %p303
    // Predicated region
    $region9: #{forward.3} parent=5 // pred_check
      _
    $region10: #{forward.3} parent=5 // pred_check_branch
      %306 = sbr.rel (%p303) target = $region12
    $region11: #{forward.3} parent=5 // pred_region
      %s307 = ssub.s32 %s17, 1
      // Predicated region
      $region13: #{forward.3} parent=11 // pred_check
        %p308 = pneg %p78
      $region14: #{forward.3} parent=11 // pred_check_branch
        %310 = sbr.rel (%p308) target = $region16
      $region15: #{forward.3} parent=11 // pred_region
        _
      $region16: #{forward.3} parent=11 // pred_fallthru
        _
      // Predicated region
      $region17: #{forward.3} parent=11 // pred_check
        %p311 = pneg %p99
      $region18: #{forward.3} parent=11 // pred_check_branch
        %313 = sbr.rel (%p311) target = $region20
      $region19: #{forward.3} parent=11 // pred_region
        _
      $region20: #{forward.3} parent=11 // pred_fallthru
        _
      // Predicated region
      $region21: #{forward.3} parent=11 // pred_check
        %p314 = pneg %p120
      $region22: #{forward.3} parent=11 // pred_check_branch
        %316 = sbr.rel (%p314) target = $region24
      $region23: #{forward.3} parent=11 // pred_region
        _
      $region24: #{forward.3} parent=11 // pred_fallthru
        _
      // Predicated region
      $region25: #{forward.3} parent=11 // pred_check
        %p317 = pneg %p141
      $region26: #{forward.3} parent=11 // pred_check_branch
        %319 = sbr.rel (%p317) target = $region28
      $region27: #{forward.3} parent=11 // pred_region
        _
      $region28: #{forward.3} parent=11 // pred_fallthru
        _
      // Predicated region
      $region29: #{forward.3} parent=11 // pred_check
        %p320 = pneg %p162
      $region30: #{forward.3} parent=11 // pred_check_branch
        %322 = sbr.rel (%p320) target = $region32
      $region31: #{forward.3} parent=11 // pred_region
        _
      $region32: #{forward.3} parent=11 // pred_fallthru
        _
      // Predicated region
      $region33: #{forward.3} parent=11 // pred_check
        %p323 = pneg %p183
      $region34: #{forward.3} parent=11 // pred_check_branch
        %325 = sbr.rel (%p323) target = $region36
      $region35: #{forward.3} parent=11 // pred_region
        _
      $region36: #{forward.3} parent=11 // pred_fallthru
        _
      // Predicated region
      $region37: #{forward.3} parent=11 // pred_check
        %p326 = pneg %p204
      $region38: #{forward.3} parent=11 // pred_check_branch
        %328 = sbr.rel (%p326) target = $region40
      $region39: #{forward.3} parent=11 // pred_region
        _
      $region40: #{forward.3} parent=11 // pred_fallthru
        _
      // Predicated region
      $region41: #{forward.3} parent=11 // pred_check
        %p329 = pneg %p225
      $region42: #{forward.3} parent=11 // pred_check_branch
        %331 = sbr.rel (%p329) target = $region44
      $region43: #{forward.3} parent=11 // pred_region
        _
      $region44: #{forward.3} parent=11 // pred_fallthru
        _
      // Predicated region
      $region45: #{forward.3} parent=11 // pred_check
        %p332 = pneg %p246
      $region46: #{forward.3} parent=11 // pred_check_branch
        %334 = sbr.rel (%p332) target = $region48
      $region47: #{forward.3} parent=11 // pred_region
        _
      $region48: #{forward.3} parent=11 // pred_fallthru
        _
      // Predicated region
      $region49: #{forward.3} parent=11 // pred_check
        %p335 = pneg %p267
      $region50: #{forward.3} parent=11 // pred_check_branch
        %337 = sbr.rel (%p335) target = $region52
      $region51: #{forward.3} parent=11 // pred_region
        _
      $region52: #{forward.3} parent=11 // pred_fallthru
        _
    $region12: #{forward.3} parent=5 // pred_fallthru
      _
    %p338 = scmp.lt.s32.totalorder %s17, 2
    // Predicated region
    $region53: #{forward.3} parent=5 // pred_check
      %p339 = pneg %p338
    $region54: #{forward.3} parent=5 // pred_check_branch
      %341 = sbr.rel (%p339) target = $region56
    $region55: #{forward.3} parent=5 // pred_region
      // Predicated region
      $region57: #{forward.3} parent=55 // pred_check
        %p342 = pneg %p51
      $region58: #{forward.3} parent=55 // pred_check_branch
        %344 = sbr.rel (%p342) target = $region60
      $region59: #{forward.3} parent=55 // pred_region
        %s345 = smul.u32 2, %s25
        %p346 = scmp.lt.s32.totalorder %s24, 1
        %s347 = scalar_select %p346, %s24, 1
        %p348 = scmp.lt.s32.totalorder %s345, 1
        %s349 = scalar_select %p348, %s345, 1
        %s350 = smul.addr %s349, 2
        %s351 = smul.addr %s347, 4
        %s352 = sadd.s32 %s350, %s351
        %s353 = smul.addr %s352, 4
        %s354 = scalar_lea.vmem %s0, %s353
        %s355 = smul.u32 2, %s25
      $region60: #{forward.3} parent=55 // pred_fallthru
        _
    $region56: #{forward.3} parent=5 // pred_fallthru
      _
    %p356 = scmp.le.s32.totalorder 1, %s17
    %p357 = scmp.lt.s32.totalorder %s17, 3
    %p358 = pnand %p356, %p357
    %p359 = pneg %p358
    // Predicated region
    $region61: #{forward.3} parent=5 // pred_check
      _
    $region62: #{forward.3} parent=5 // pred_check_branch
      %361 = sbr.rel (%p358) target = $region64
    $region63: #{forward.3} parent=5 // pred_region
      %s362 = ssub.s32 %s17, 1
      %s363 = smul.u32 2, %s27
      %p364 = scmp.lt.s32.totalorder %s26, 1
      %s365 = scalar_select %p364, %s26, 1
      %p366 = scmp.lt.s32.totalorder %s363, 1
      %s367 = scalar_select %p366, %s363, 1
      %s368 = smul.addr %s367, 2
      %s369 = smul.addr %s365, 4
      %s370 = sadd.s32 %s368, %s369
      %s371 = smul.addr %s370, 4
      %s372 = scalar_lea.vmem %s0, %s371
      %p373 = pneg %p57
      %p374 = pneg %p54
      %p375 = pneg %p78
      %p376 = pneg %p75
      %p377 = pneg %p99
      %p378 = pneg %p96
      %p379 = pneg %p120
      %p380 = pneg %p117
      %p381 = pneg %p141
      %p382 = pneg %p138
      %p383 = pneg %p162
      %p384 = pneg %p159
      %p385 = pneg %p183
      %p386 = pneg %p180
      %p387 = pneg %p204
      %p388 = pneg %p201
      %p389 = pneg %p225
      %p390 = pneg %p222
      %p391 = pneg %p246
      %p392 = pneg %p243
      %p393 = pneg %p267
      %p394 = pneg %p264
      %p395 = pneg %p293
      %p396 = pneg %p290
      %p397 = scmp.lt.s32.totalorder %s26, 1
      %s398 = scalar_select %p397, %s26, 1
      %s399 = smul.addr %s398, 8
      %s400 = scalar_lea.vmem %s11, %s399
      %s401 = smul.u32 2, %s27
      %p402 = scmp.lt.s32.totalorder %s26, 1
      %s403 = scalar_select %p402, %s26, 1
      %p404 = scmp.lt.s32.totalorder %s401, 1
      %s405 = scalar_select %p404, %s401, 1
      %s406 = smul.addr %s405, 2
      %s407 = smul.addr %s403, 4
      %s408 = sadd.s32 %s406, %s407
      %s409 = smul.addr %s408, 4
      %s410 = scalar_lea.vmem %s0, %s409
      %s411 = smul.u32 2, %s27
      %p412 = scmp.lt.s32.totalorder %s26, 1
      %s413 = scalar_select %p412, %s26, 1
      %s414 = smul.addr %s413, 8
      %s415 = scalar_lea.vmem %s11, %s414
      %p416 = scmp.eq.s32.totalorder %s27, 0
      // Predicated region
      $region65: #{forward.3} parent=63 // pred_check
        %p417 = pneg %p416
      $region66: #{forward.3} parent=63 // pred_check_branch
        %419 = sbr.rel (%p417) target = $region68
      $region67: #{forward.3} parent=63 // pred_region
        %420 = vst [vmem:[#allocation2] sm:$0xff] 0.0
      $region68: #{forward.3} parent=63 // pred_fallthru
        _
      %v421 = vld [vmem:[%s410] sm:$0xff]
      %v422 = vld [vmem:[%s410 + $0x8] sm:$0xff]
      %v423 = vlaneseq
      %v424 = vand.u32 %v423, 127
      %v425 = vld [vmem:[%s1] sm:$0xf]
      %v426 = vld [vmem:[%s1 + $0x4] sm:$0xf]
      %v427 = vld [vmem:[%s1 + $0x8] sm:$0xf]
      %v428 = vld [vmem:[%s1 + $0xc] sm:$0xf]
      %v429 = vld [vmem:[%s1 + $0x10] sm:$0xf]
      %v430 = vld [vmem:[%s1 + $0x14] sm:$0xf]
      %v431 = vld [vmem:[%s1 + $0x18] sm:$0xf]
      %v432 = vld [vmem:[%s1 + $0x1c] sm:$0xf]
      %v433 = vld [vmem:[%s1 + $0x20] sm:$0xf]
      %v434 = vld [vmem:[%s1 + $0x24] sm:$0xf]
      %v435 = vld [vmem:[%s1 + $0x28] sm:$0xf]
      %v436 = vld [vmem:[%s1 + $0x2c] sm:$0xf]
      %v437 = vld [vmem:[%s1 + $0x30] sm:$0xf]
      %v438 = vld [vmem:[%s1 + $0x34] sm:$0xf]
      %v439 = vld [vmem:[%s1 + $0x38] sm:$0xf]
      %v440 = vld [vmem:[%s1 + $0x3c] sm:$0xf]
      %v441 = vld [vmem:[%s1 + $0x40] sm:$0xf]
      %v442 = vld [vmem:[%s1 + $0x44] sm:$0xf]
      %v443 = vld [vmem:[%s1 + $0x48] sm:$0xf]
      %v444 = vld [vmem:[%s1 + $0x4c] sm:$0xf]
      %v445 = vld [vmem:[%s1 + $0x50] sm:$0xf]
      %v446 = vld [vmem:[%s1 + $0x54] sm:$0xf]
      %v447 = vld [vmem:[%s1 + $0x58] sm:$0xf]
      %v448 = vld [vmem:[%s1 + $0x5c] sm:$0xf]
      %v449 = vld [vmem:[%s1 + $0x60] sm:$0xf]
      %v450 = vld [vmem:[%s1 + $0x64] sm:$0xf]
      %v451 = vld [vmem:[%s1 + $0x68] sm:$0xf]
      %v452 = vld [vmem:[%s1 + $0x6c] sm:$0xf]
      %v453 = vld [vmem:[%s1 + $0x70] sm:$0xf]
      %v454 = vld [vmem:[%s1 + $0x74] sm:$0xf]
      %v455 = vld [vmem:[%s1 + $0x78] sm:$0xf]
      %v456 = vld [vmem:[%s1 + $0x7c] sm:$0xf]
      %v457 = vld [vmem:[%s2] sm:$0x1]
      %v459 = vperm.slane %v457, 0
      %v463 = vunpack.c.l.b16 %v421
      %v464 = vunpack.c.h.b16 %v421
      %v465 = vunpack.c.l.b16 %v422
      %v466 = vunpack.c.h.b16 %v422
      %v467 = vpack.c.b16 %v465, %v463
      %v468 = vpack.c.b16 %v466, %v464
      %v503 = vunpack.c.l.b16 %v425
      %v504 = vunpack.c.l.b16 %v426
      %v505 = vunpack.c.l.b16 %v427
      %v506 = vunpack.c.l.b16 %v428
      %v507 = vunpack.c.l.b16 %v429
      %v508 = vunpack.c.l.b16 %v430
      %v509 = vunpack.c.l.b16 %v431
      %v510 = vunpack.c.l.b16 %v432
      %v511 = vunpack.c.l.b16 %v433
      %v512 = vunpack.c.l.b16 %v434
      %v513 = vunpack.c.l.b16 %v435
      %v514 = vunpack.c.l.b16 %v436
      %v515 = vunpack.c.l.b16 %v437
      %v516 = vunpack.c.l.b16 %v438
      %v517 = vunpack.c.l.b16 %v439
      %v518 = vunpack.c.l.b16 %v440
      %v519 = vunpack.c.l.b16 %v441
      %v520 = vunpack.c.l.b16 %v442
      %v521 = vunpack.c.l.b16 %v443
      %v522 = vunpack.c.l.b16 %v444
      %v523 = vunpack.c.l.b16 %v445
      %v524 = vunpack.c.l.b16 %v446
      %v525 = vunpack.c.l.b16 %v447
      %v526 = vunpack.c.l.b16 %v448
      %v527 = vunpack.c.l.b16 %v449
      %v528 = vunpack.c.l.b16 %v450
      %v529 = vunpack.c.l.b16 %v451
      %v530 = vunpack.c.l.b16 %v452
      %v531 = vunpack.c.l.b16 %v453
      %v532 = vunpack.c.l.b16 %v454
      %v533 = vunpack.c.l.b16 %v455
      %v534 = vunpack.c.l.b16 %v456
      %v535 = vpack.c.b16 %v504, %v503
      %v536 = vpack.c.b16 %v506, %v505
      %v537 = vpack.c.b16 %v508, %v507
      %v538 = vpack.c.b16 %v510, %v509
      %v539 = vpack.c.b16 %v512, %v511
      %v540 = vpack.c.b16 %v514, %v513
      %v541 = vpack.c.b16 %v516, %v515
      %v542 = vpack.c.b16 %v518, %v517
      %v543 = vpack.c.b16 %v520, %v519
      %v544 = vpack.c.b16 %v522, %v521
      %v545 = vpack.c.b16 %v524, %v523
      %v546 = vpack.c.b16 %v526, %v525
      %v547 = vpack.c.b16 %v528, %v527
      %v548 = vpack.c.b16 %v530, %v529
      %v549 = vpack.c.b16 %v532, %v531
      %v550 = vpack.c.b16 %v534, %v533
      %567 = vmatpush.bf16.msra.mxu0 %v542
      %568 = vmatpush.bf16.msra.mxu0 %v541
      %569 = vmatpush.bf16.msra.mxu0 %v540
      %570 = vmatpush.bf16.msra.mxu0 %v539
      %571 = vmatpush.bf16.msra.mxu0 %v538
      %572 = vmatpush.bf16.msra.mxu0 %v537
      %573 = vmatpush.bf16.msra.mxu0 %v536
      %574 = vmatpush.bf16.msra.mxu0 %v535
      %575 = vmatmul.bf16.gmra.mxu0 %v467
      %v576 = vpop.f32.mrf.mxu0
      %v577 = vadd.f32 %v459, %v576
      %v578 = vpop.f32.mrf.mxu0
      %v579 = vadd.f32 %v459, %v578
      %580 = vdwg.mxu0
      %581 = vmatpush.bf16.msra.mxu0 %v550
      %582 = vmatpush.bf16.msra.mxu0 %v549
      %583 = vmatpush.bf16.msra.mxu0 %v548
      %584 = vmatpush.bf16.msra.mxu0 %v547
      %585 = vmatpush.bf16.msra.mxu0 %v546
      %586 = vmatpush.bf16.msra.mxu0 %v545
      %587 = vmatpush.bf16.msra.mxu0 %v544
      %588 = vmatpush.bf16.msra.mxu0 %v543
      %589 = vmatmul.bf16.gmra.mxu0 %v468
      %v590 = vpop.f32.mrf.mxu0
      %v591 = vadd.f32 %v577, %v590
      %v592 = vpop.f32.mrf.mxu0
      %v593 = vadd.f32 %v579, %v592
      %594 = vdwg.mxu0
      %vm595 = vcmp.lt.s32.totalorder %v424, 32
      %v596 = vsel %vm595, 1, 0
      %vm597 = vcmp.eq.s32.totalorder %v596, 1
      %v598 = vsel %vm597, %v591, 0.0
      %v599 = vsel %vm597, %v593, 0.0
      %600 = vadd.xlane.f32.xlu0 %v598
      %v601 = vpop.xlane.xlu0 %600
      %602 = vadd.xlane.f32.xlu0 %v599
      %v603 = vpop.xlane.xlu0 %602
      %v604 = vmul.f32 %v601, 0.03125
      %v605 = vmul.f32 %v603, 0.03125
      %v606 = vsub.f32 %v591, %v604
      %v607 = vsub.f32 %v593, %v605
      %v608 = vsel %vm597, %v606, 0.0
      %v609 = vsel %vm597, %v607, 0.0
      %v610 = vmul.f32 %v608, %v608
      %v611 = vmul.f32 %v609, %v609
      %612 = vadd.xlane.f32.xlu0 %v610
      %v613 = vpop.xlane.xlu0 %612
      %614 = vadd.xlane.f32.xlu0 %v611
      %v615 = vpop.xlane.xlu0 %614
      %v616 = vmul.f32 %v613, 0.03125
      %v617 = vmul.f32 %v615, 0.03125
      %v618 = vadd.f32 %v616, 1e-06
      %v619 = vadd.f32 %v617, 1e-06
      %v620 = vrsqrt.pop %v618
      %v621 = vmul.f32 %v620, %v618
      %v622 = vmul.f32 %v621, %v620
      %v623 = vmul.f32 0.5, %v622
      %v624 = vsub.f32 1.5, %v623
      %v625 = vmul.f32 %v620, %v624
      %vm626 = vweird.f32 %v618
      %vm627 = vweird.f32 %v620
      %vm628 = vmor %vm626, %vm627
      %v629 = vsel %vm628, %v620, %v625
      %v630 = vrsqrt.pop %v619
      %v631 = vmul.f32 %v630, %v619
      %v632 = vmul.f32 %v631, %v630
      %v633 = vmul.f32 0.5, %v632
      %v634 = vsub.f32 1.5, %v633
      %v635 = vmul.f32 %v630, %v634
      %vm636 = vweird.f32 %v619
      %vm637 = vweird.f32 %v630
      %vm638 = vmor %vm636, %vm637
      %v639 = vsel %vm638, %v630, %v635
      %v640 = vmul.f32 %v606, %v629
      %v641 = vmul.f32 %v607, %v639
      %v642 = vld [vmem:[%s3] sm:$0x1]
      %v644 = vperm.slane %v642, 0
      %v646 = vmul.f32 %v640, %v644
      %v647 = vmul.f32 %v641, %v644
      %v648 = vld [vmem:[%s4] sm:$0x1]
      %v650 = vperm.slane %v648, 0
      %v652 = vadd.f32 %v646, %v650
      %v653 = vadd.f32 %v647, %v650
      %v654 = vpack.c.bf16 %v653, %v652
      %v655 = vld [vmem:[%s5] sm:$0xf]
      %v656 = vld [vmem:[%s5 + $0x4] sm:$0xf]
      %v657 = vld [vmem:[%s5 + $0x8] sm:$0xf]
      %v658 = vld [vmem:[%s5 + $0xc] sm:$0xf]
      %v659 = vld [vmem:[%s5 + $0x10] sm:$0xf]
      %v660 = vld [vmem:[%s5 + $0x14] sm:$0xf]
      %v661 = vld [vmem:[%s5 + $0x18] sm:$0xf]
      %v662 = vld [vmem:[%s5 + $0x1c] sm:$0xf]
      %v663 = vld [vmem:[%s5 + $0x20] sm:$0xf]
      %v664 = vld [vmem:[%s5 + $0x24] sm:$0xf]
      %v665 = vld [vmem:[%s5 + $0x28] sm:$0xf]
      %v666 = vld [vmem:[%s5 + $0x2c] sm:$0xf]
      %v667 = vld [vmem:[%s5 + $0x30] sm:$0xf]
      %v668 = vld [vmem:[%s5 + $0x34] sm:$0xf]
      %v669 = vld [vmem:[%s5 + $0x38] sm:$0xf]
      %v670 = vld [vmem:[%s5 + $0x3c] sm:$0xf]
      %v671 = vld [vmem:[%s6] sm:$0x1]
      %v673 = vperm.slane %v671, 0
      %v691 = vunpack.c.l.b16 %v655
      %v692 = vunpack.c.l.b16 %v656
      %v693 = vunpack.c.l.b16 %v657
      %v694 = vunpack.c.l.b16 %v658
      %v695 = vunpack.c.l.b16 %v659
      %v696 = vunpack.c.l.b16 %v660
      %v697 = vunpack.c.l.b16 %v661
      %v698 = vunpack.c.l.b16 %v662
      %v699 = vunpack.c.l.b16 %v663
      %v700 = vunpack.c.l.b16 %v664
      %v701 = vunpack.c.l.b16 %v665
      %v702 = vunpack.c.l.b16 %v666
      %v703 = vunpack.c.l.b16 %v667
      %v704 = vunpack.c.l.b16 %v668
      %v705 = vunpack.c.l.b16 %v669
      %v706 = vunpack.c.l.b16 %v670
      %v707 = vpack.c.b16 %v692, %v691
      %v708 = vpack.c.b16 %v694, %v693
      %v709 = vpack.c.b16 %v696, %v695
      %v710 = vpack.c.b16 %v698, %v697
      %v711 = vpack.c.b16 %v700, %v699
      %v712 = vpack.c.b16 %v702, %v701
      %v713 = vpack.c.b16 %v704, %v703
      %v714 = vpack.c.b16 %v706, %v705
      %723 = vmatpush.bf16.msra.mxu0 %v714
      %724 = vmatpush.bf16.msra.mxu0 %v713
      %725 = vmatpush.bf16.msra.mxu0 %v712
      %726 = vmatpush.bf16.msra.mxu0 %v711
      %727 = vmatpush.bf16.msra.mxu0 %v710
      %728 = vmatpush.bf16.msra.mxu0 %v709
      %729 = vmatpush.bf16.msra.mxu0 %v708
      %730 = vmatpush.bf16.msra.mxu0 %v707
      %731 = vmatmul.bf16.gmra.mxu0 %v654
      %v732 = vpop.f32.mrf.mxu0
      %v733 = vadd.f32 %v673, %v732
      %v734 = vpop.f32.mrf.mxu0
      %v735 = vadd.f32 %v673, %v734
      %736 = vdwg.mxu0
      %v737 = vlaneseq
      %v738 = vshrl.u32 %v737, 7
      %v739 = vadd.s32 %v738, 8
      %s740 = smul.u32 %s27, 16
      %v741 = vstv %s740
      %v742 = vadd.s32 %v738, %v741
      %v743 = vadd.s32 %v739, %v741
      %vm744 = vcmp.lt.s32.totalorder %v742, 16
      %vm745 = vcmp.lt.s32.totalorder %v743, 16
      %v746 = vsel %vm744, 1, 0
      %v747 = vsel %vm745, 1, 0
      %vm748 = vcmp.eq.s32.totalorder %v746, 1
      %vm749 = vcmp.eq.s32.totalorder %v747, 1
      %v750 = vsel %vm748, %v733, 0.0
      %v751 = vsel %vm749, %v735, 0.0
      %v752 = vadd.f32 %v750, %v751
      %v753 = vrot.slane %v752, 4
      %v754 = vadd.f32 %v752, %v753
      %v755 = vrot.slane %v754, 2
      %v756 = vadd.f32 %v754, %v755
      %v757 = vrot.slane %v756, 1
      %v758 = vadd.f32 %v756, %v757
      %v759 = vld [vmem:[#allocation2] sm:$0xff]
      %v760 = vadd.f32 %v759, %v758
      %761 = vst [vmem:[#allocation2] sm:$0xff] %v760
      // Predicated region
      $region69: #{forward.3} parent=63 // pred_check
        %p762 = pneg %p416
      $region70: #{forward.3} parent=63 // pred_check_branch
        %764 = sbr.rel (%p762) target = $region72
      $region71: #{forward.3} parent=63 // pred_region
        %v765 = vld [vmem:[#allocation2] sm:$0xff]
        %v766 = vmul.f32 %v765, 0.0625
        %v767 = vsel %vm597, %v766, 0.0
        %768 = vadd.xlane.f32.xlu0 %v767
        %v769 = vpop.xlane.xlu0 %768
        %v770 = vmul.f32 %v769, 0.03125
        %v771 = vsub.f32 %v766, %v770
        %v772 = vsel %vm597, %v771, 0.0
        %v773 = vmul.f32 %v772, %v772
        %774 = vadd.xlane.f32.xlu0 %v773
        %v775 = vpop.xlane.xlu0 %774
        %v776 = vmul.f32 %v775, 0.03125
        %v777 = vadd.f32 %v776, 1e-06
        %v778 = vrsqrt.pop %v777
        %v779 = vmul.f32 %v778, %v777
        %v780 = vmul.f32 %v779, %v778
        %v781 = vmul.f32 0.5, %v780
        %v782 = vsub.f32 1.5, %v781
        %v783 = vmul.f32 %v778, %v782
        %vm784 = vweird.f32 %v777
        %vm785 = vweird.f32 %v778
        %vm786 = vmor %vm784, %vm785
        %v787 = vsel %vm786, %v778, %v783
        %v788 = vmul.f32 %v771, %v787
        %v789 = vld [vmem:[%s7] sm:$0x1]
        %v791 = vperm.slane %v789, 0
        %v793 = vmul.f32 %v788, %v791
        %v794 = vld [vmem:[%s8] sm:$0x1]
        %v796 = vperm.slane %v794, 0
        %v798 = vadd.f32 %v793, %v796
        %v799 = vld [vmem:[%s9] sm:$0xff]
        %v800 = vld [vmem:[%s9 + $0x8] sm:$0xff]
        %v801 = vld [vmem:[%s9 + $0x10] sm:$0xff]
        %v802 = vld [vmem:[%s9 + $0x18] sm:$0xff]
        %v803 = vld [vmem:[%s9 + $0x20] sm:$0xff]
        %v804 = vld [vmem:[%s9 + $0x28] sm:$0xff]
        %v805 = vld [vmem:[%s9 + $0x30] sm:$0xff]
        %v806 = vld [vmem:[%s9 + $0x38] sm:$0xff]
        %v807 = vld [vmem:[%s9 + $0x40] sm:$0xff]
        %v808 = vld [vmem:[%s9 + $0x48] sm:$0xff]
        %v809 = vld [vmem:[%s9 + $0x50] sm:$0xff]
        %v810 = vld [vmem:[%s9 + $0x58] sm:$0xff]
        %v811 = vld [vmem:[%s9 + $0x60] sm:$0xff]
        %v812 = vld [vmem:[%s9 + $0x68] sm:$0xff]
        %v813 = vld [vmem:[%s9 + $0x70] sm:$0xff]
        %v814 = vld [vmem:[%s9 + $0x78] sm:$0xff]
        %v815 = vld [vmem:[%s10] sm:$0x1]
        %v817 = vperm.slane %v815, 0
        %819 = vmatpush.msra.mxu0 %v814
        %820 = vmatpush.msra.mxu0 %v813
        %821 = vmatpush.msra.mxu0 %v812
        %822 = vmatpush.msra.mxu0 %v811
        %823 = vmatpush.msra.mxu0 %v810
        %824 = vmatpush.msra.mxu0 %v809
        %825 = vmatpush.msra.mxu0 %v808
        %826 = vmatpush.msra.mxu0 %v807
        %827 = vmatpush.msra.mxu0 %v806
        %828 = vmatpush.msra.mxu0 %v805
        %829 = vmatpush.msra.mxu0 %v804
        %830 = vmatpush.msra.mxu0 %v803
        %831 = vmatpush.msra.mxu0 %v802
        %832 = vmatpush.msra.mxu0 %v801
        %833 = vmatpush.msra.mxu0 %v800
        %834 = vmatpush.msra.mxu0 %v799
        %835 = vmatmul.f32.gmra.mxu0 %v798
        %v836 = vpop.f32.mrf.mxu0
        %v837 = vadd.f32 %v817, %v836
        %838 = vdwg.mxu0
        %839 = vst [vmem:[%s415] sm:$0xff] %v837
      $region72: #{forward.3} parent=63 // pred_fallthru
        _
      %p840 = scmp.lt.s32.totalorder %s26, 1
      %s841 = scalar_select %p840, %s26, 1
      %s842 = smul.addr %s841, 8
      %s843 = scalar_lea.vmem %s11, %s842
      // Predicated region
      $region73: #{forward.3} parent=63 // pred_check
        %p844 = pneg %p290
      $region74: #{forward.3} parent=63 // pred_check_branch
        %846 = sbr.rel (%p844) target = $region76
      $region75: #{forward.3} parent=63 // pred_region
        _
      $region76: #{forward.3} parent=63 // pred_fallthru
        _
    $region64: #{forward.3} parent=5 // pred_fallthru
      _
    %p847 = scmp.le.s32.totalorder 2, %s17
    // Predicated region
    $region77: #{forward.3} parent=5 // pred_check
      %p848 = pneg %p847
    $region78: #{forward.3} parent=5 // pred_check_branch
      %850 = sbr.rel (%p848) target = $region80
    $region79: #{forward.3} parent=5 // pred_region
      %s851 = ssub.s32 %s17, 2
      // Predicated region
      $region81: #{forward.3} parent=79 // pred_check
        %p852 = pneg %p296
      $region82: #{forward.3} parent=79 // pred_check_branch
        %854 = sbr.rel (%p852) target = $region84
      $region83: #{forward.3} parent=79 // pred_region
        %p855 = scmp.lt.s32.totalorder %s28, 1
        %s856 = scalar_select %p855, %s28, 1
        %s857 = smul.addr %s856, 8
        %s858 = scalar_lea.vmem %s11, %s857
      $region84: #{forward.3} parent=79 // pred_fallthru
        _
    $region80: #{forward.3} parent=5 // pred_fallthru
      _
  $region6: #{forward.3} parent=0 // loop_footer
    %s21 = sadd.s32 1, %s17
  $region7: #{forward.3} parent=0 // loop_footer_branch
    %16 = sbr.rel target = $region3
  $region8: #{forward.3} parent=0 // loop_exit
    _

</llo_original>
